<compile_context>
chip_gen: v7x
topology: tpu7x:2x2x1
jax: 0.10.0
libtpu: 0.0.40
codegen_flags: <defaults>
</compile_context>

<pallas_src>
import functools

import jax
import jax.numpy as jnp
from jax.experimental import pallas as pl
from jax.experimental.pallas import tpu as pltpu


def _round_up(x, m):
    return ((x + m - 1) // m) * m


def _vqvae_kernel(tok_ref, wenc_t_ref, benc_ref, cb_ref, cbsq_ref,
                  cbdec_t_ref, bdec_ref, xrec_ref, idx_ref, loss_ref,
                  *, c_in, num_codes, tile_tokens, valid_tokens):
    """One tile of tokens (channel-major): encode -> quantize -> decode -> losses."""
    i = pl.program_id(0)

    x_cm = tok_ref[...]                                        # (2C, TL)

    # ---- encoder: 1x1 conv as matmul (MXU), channel-major ----
    z = (jnp.dot(wenc_t_ref[...], x_cm, preferred_element_type=jnp.float32)
         + benc_ref[...])                                      # (D, TL)

    # ---- vector quantization: squared distance to every code ----
    cross = jnp.dot(cb_ref[...], z, preferred_element_type=jnp.float32)  # (K, TL)
    z_sq = jnp.sum(z * z, axis=0, keepdims=True)               # (1, TL)
    dist = z_sq - 2.0 * cross + cbsq_ref[...]                  # (K, TL)

    min_d = jnp.min(dist, axis=0, keepdims=True)               # (1, TL)
    code_iota = jax.lax.broadcasted_iota(jnp.int32, dist.shape, 0)
    # first index attaining the minimum (matches torch.argmin tie-breaking)
    idx = jnp.min(jnp.where(dist <= min_d, code_iota, num_codes),
                  axis=0, keepdims=True)                       # (1, TL) int32
    idx_ref[...] = idx                                         # lane-dense store

    # one-hot gather of the decoder-folded codebook via MXU -> x_recon directly
    onehot = (code_iota == idx).astype(jnp.float32)            # (K, TL)
    x_rec = (jnp.dot(cbdec_t_ref[...], onehot, preferred_element_type=jnp.float32)
             + bdec_ref[...])                                  # (C, TL)
    xrec_ref[...] = x_rec                                      # lane-dense store

    # ---- per-tile partial loss sums (reduced in the wrapper) ----
    # mask out padding tokens (if L was padded up to a tile multiple)
    pos = i * tile_tokens + jax.lax.broadcasted_iota(
        jnp.int32, (1, tile_tokens), 1)
    valid = pos < valid_tokens                                 # (1, TL)

    x_tgt = x_cm[:c_in, :]                                     # first C rows = x
    diff = x_rec - x_tgt
    recon_sum = jnp.sum(
        jnp.where(valid, jnp.sum(diff * diff, axis=0, keepdims=True), 0.0))
    # q is the argmin code, so ||q - z||^2 == min_k dist[k] per token
    # (clamped at 0 to guard against tiny negative fp round-off)
    vq_sum = jnp.sum(jnp.where(valid, jnp.maximum(min_d, 0.0), 0.0))

    lane = jax.lax.broadcasted_iota(jnp.int32, (1, 1, 128), 2)
    loss_ref[...] = jnp.where(lane == 0, recon_sum,
                              jnp.where(lane == 1, vq_sum, 0.0))


def vqvae_forward(x, x_cond, y, params, *, tile_tokens=2048):
    """x, x_cond: NCHW float32. Returns (x_recon NCHW, indices NHW, losses)."""
    del y  # TODO(synk): unused conditioning label (no semantics in base class)
    x = x.astype(jnp.float32)
    x_cond = x_cond.astype(jnp.float32)
    n, c, h, w = x.shape
    k, d = params["codebook"].shape
    l = n * h * w

    # NCHW -> channel-major tokens (C, L); concatenate condition along channels.
    def to_cm(a):
        return jnp.transpose(a, (1, 0, 2, 3)).reshape(a.shape[1], l)

    tok = jnp.concatenate([to_cm(x), to_cm(x_cond)], axis=0)       # (2C, L)

    tile = min(_round_up(tile_tokens, 128), _round_up(l, 128))
    l_pad = _round_up(l, tile)
    if l_pad != l:
        tok = jnp.pad(tok, ((0, 0), (0, l_pad - l)))
    num_tiles = l_pad // tile

    # kernel-friendly, precomputed parameter layouts
    cb = params["codebook"].astype(jnp.float32)                    # (K, D)
    w_enc_t = params["w_enc"].T.astype(jnp.float32)                # (D, 2C)
    b_enc = params["b_enc"].reshape(d, 1).astype(jnp.float32)      # (D, 1)
    cb_sq = jnp.sum(cb * cb, axis=1, keepdims=True)                # (K, 1)
    cb_dec_t = (cb @ params["w_dec"]).T.astype(jnp.float32)        # (C, K) decoder folded
    b_dec = params["b_dec"].reshape(c, 1).astype(jnp.float32)      # (C, 1)

    kernel = functools.partial(_vqvae_kernel, c_in=c, num_codes=k,
                               tile_tokens=tile, valid_tokens=l)
    full = lambda i: (0, 0)
    x_rec_cm, idx_row, loss_tiles = pl.pallas_call(
        kernel,
        out_shape=(
            jax.ShapeDtypeStruct((c, l_pad), jnp.float32),
            jax.ShapeDtypeStruct((1, l_pad), jnp.int32),
            jax.ShapeDtypeStruct((num_tiles, 1, 128), jnp.float32),
        ),
        grid=(num_tiles,),
        in_specs=[
            pl.BlockSpec((2 * c, tile), lambda i: (0, i)),         # tokens
            pl.BlockSpec((d, 2 * c), full),                        # w_enc^T
            pl.BlockSpec((d, 1), full),                            # b_enc
            pl.BlockSpec((k, d), full),                            # codebook
            pl.BlockSpec((k, 1), full),                            # ||e||^2
            pl.BlockSpec((c, k), full),                            # (codebook @ w_dec)^T
            pl.BlockSpec((c, 1), full),                            # b_dec
        ],
        out_specs=(
            pl.BlockSpec((c, tile), lambda i: (0, i)),             # x_recon (lane-dense)
            pl.BlockSpec((1, tile), lambda i: (0, i)),             # indices (lane-dense)
            pl.BlockSpec((1, 1, 128), lambda i: (i, 0, 0)),        # per-tile losses
        ),
        compiler_params=pltpu.CompilerParams(
            dimension_semantics=("parallel",)),
    )(tok, w_enc_t, b_enc, cb, cb_sq, cb_dec_t, b_dec)

    x_recon = jnp.transpose(x_rec_cm[:, :l].reshape(c, n, h, w), (1, 0, 2, 3))
    indices = idx_row[0, :l].reshape(n, h, w)
    loss_sums = jnp.sum(loss_tiles, axis=0)                        # (1, 128)
    recon_loss = loss_sums[0, 0] / (l * c)
    vq_loss = loss_sums[0, 1] / (l * d)     # codebook loss
    commitment_loss = vq_loss               # same value in the forward pass
    return x_recon, indices, recon_loss, vq_loss, commitment_loss


def init_params(key, *, c_in, embedding_dim, num_embeddings):
    k1, k2, k3, k4, k5 = jax.random.split(key, 5)
    scale = 0.1
    return {
        "w_enc": scale * jax.random.normal(k1, (2 * c_in, embedding_dim), jnp.float32),
        "b_enc": jnp.zeros((1, embedding_dim), jnp.float32),
        "codebook": scale * jax.random.normal(k2, (num_embeddings, embedding_dim), jnp.float32),
        "w_dec": scale * jax.random.normal(k3, (embedding_dim, c_in), jnp.float32),
        "b_dec": jnp.zeros((1, c_in), jnp.float32),
    }


def _reference_forward(x, x_cond, params):
    n, c, h, w = x.shape
    tok = jnp.concatenate(
        [jnp.transpose(a, (0, 2, 3, 1)).reshape(n * h * w, c) for a in (x, x_cond)],
        axis=-1)
    z = tok @ params["w_enc"] + params["b_enc"]
    cb = params["codebook"]
    dist = (jnp.sum(z * z, -1, keepdims=True) - 2 * z @ cb.T
            + jnp.sum(cb * cb, -1)[None, :])
    idx = jnp.argmin(dist, axis=-1)
    q = cb[idx]
    x_rec = q @ params["w_dec"] + params["b_dec"]
    recon = jnp.mean((x_rec - tok[:, :c]) ** 2)
    vq = jnp.mean((q - z) ** 2)
    x_rec = jnp.transpose(x_rec.reshape(n, h, w, c), (0, 3, 1, 2))
    return x_rec, idx.reshape(n, h, w), recon, vq


if __name__ == "__main__":
    key = jax.random.PRNGKey(0)
    kx, kc, kp = jax.random.split(key, 3)

    # small shapes consistent with the module: image_shape=(4,16,16), batch=2
    N, C, H, W = 2, 4, 16, 16
    NUM_EMBEDDINGS, EMBEDDING_DIM = 64, 32

    x = jax.random.normal(kx, (N, C, H, W), jnp.float32)
    x_cond = jax.random.normal(kc, (N, C, H, W), jnp.float32)
    y = jnp.zeros((N,), jnp.int32)

    params = init_params(kp, c_in=C, embedding_dim=EMBEDDING_DIM,
                         num_embeddings=NUM_EMBEDDINGS)

    x_recon, indices, recon_loss, vq_loss, commit_loss = jax.block_until_ready(
        vqvae_forward(x, x_cond, y, params))

    # sanity check against pure-JAX reference
    xr_ref, idx_ref, recon_ref, vq_ref = _reference_forward(x, x_cond, params)
    assert jnp.all(indices == idx_ref)
    assert jnp.allclose(x_recon, xr_ref, atol=2e-3, rtol=2e-3)
    assert jnp.allclose(recon_loss, recon_ref, atol=1e-3, rtol=1e-3)
    assert jnp.allclose(vq_loss, vq_ref, atol=1e-3, rtol=1e-3)

    print("KERNEL_OK")
</pallas_src>

<mosaic_0001>
module attributes {stable_mosaic.version = 11 : i64} {
  func.func @_vqvae_kernel(%arg0: i32, %arg1: memref<8x512xf32, #tpu.memory_space<vmem>>, %arg2: memref<32x8xf32, #tpu.memory_space<vmem>>, %arg3: memref<32x1xf32, #tpu.memory_space<vmem>>, %arg4: memref<64x32xf32, #tpu.memory_space<vmem>>, %arg5: memref<64x1xf32, #tpu.memory_space<vmem>>, %arg6: memref<4x64xf32, #tpu.memory_space<vmem>>, %arg7: memref<4x1xf32, #tpu.memory_space<vmem>>, %arg8: memref<4x512xf32, #tpu.memory_space<vmem>>, %arg9: memref<1x512xi32, #tpu.memory_space<vmem>>, %arg10: memref<1x1x128xf32, #tpu.memory_space<vmem>>) attributes {dimension_semantics = [#tpu.dimension_semantics<parallel>], iteration_bounds = array<i64: 1>, scalar_prefetch = 0 : i64, scratch_operands = 0 : i64, tpu.core_type = #tpu.core_type<tc>, window_params = [{transform_indices = @transform_0, window_bounds = array<i64: 8, 512>}, {pipeline_mode = #tpu.pipeline_mode<synchronous>, transform_indices = @transform_1, window_bounds = array<i64: 32, 8>}, {pipeline_mode = #tpu.pipeline_mode<synchronous>, transform_indices = @transform_2, window_bounds = array<i64: 32, 1>}, {pipeline_mode = #tpu.pipeline_mode<synchronous>, transform_indices = @transform_3, window_bounds = array<i64: 64, 32>}, {pipeline_mode = #tpu.pipeline_mode<synchronous>, transform_indices = @transform_4, window_bounds = array<i64: 64, 1>}, {pipeline_mode = #tpu.pipeline_mode<synchronous>, transform_indices = @transform_5, window_bounds = array<i64: 4, 64>}, {pipeline_mode = #tpu.pipeline_mode<synchronous>, transform_indices = @transform_6, window_bounds = array<i64: 4, 1>}, {transform_indices = @transform_7, window_bounds = array<i64: 4, 512>}, {transform_indices = @transform_8, window_bounds = array<i64: 1, 512>}, {transform_indices = @transform_9, window_bounds = array<i64: 1, 1, 128>}]} {
    %c0 = arith.constant 0 : index
    %c0_0 = arith.constant 0 : index
    %0 = vector.load %arg1[%c0, %c0_0] : memref<8x512xf32, #tpu.memory_space<vmem>>, vector<8x512xf32>
    %c0_1 = arith.constant 0 : index
    %c0_2 = arith.constant 0 : index
    %1 = vector.load %arg2[%c0_1, %c0_2] : memref<32x8xf32, #tpu.memory_space<vmem>>, vector<32x8xf32>
    %cst = arith.constant dense<0.000000e+00> : vector<32x512xf32>
    %2 = tpu.matmul %1, %0, %cst {dimension_numbers = #tpu.dot_dimension_numbers<[1], [0], [0], [1], [0, 0, 1, 1], [], []>} : vector<32x8xf32>, vector<8x512xf32>, vector<32x512xf32> -> vector<32x512xf32>
    %c0_3 = arith.constant 0 : index
    %c0_4 = arith.constant 0 : index
    %3 = vector.load %arg3[%c0_3, %c0_4] : memref<32x1xf32, #tpu.memory_space<vmem>>, vector<32x1xf32>
    %4 = vector.broadcast %3 : vector<32x1xf32> to vector<32x512xf32>
    %5 = arith.addf %2, %4 : vector<32x512xf32>
    %c0_5 = arith.constant 0 : index
    %c0_6 = arith.constant 0 : index
    %6 = vector.load %arg4[%c0_5, %c0_6] : memref<64x32xf32, #tpu.memory_space<vmem>>, vector<64x32xf32>
    %cst_7 = arith.constant dense<0.000000e+00> : vector<64x512xf32>
    %7 = tpu.matmul %6, %5, %cst_7 {dimension_numbers = #tpu.dot_dimension_numbers<[1], [0], [0], [1], [0, 0, 1, 1], [], []>} : vector<64x32xf32>, vector<32x512xf32>, vector<64x512xf32> -> vector<64x512xf32>
    %8 = arith.mulf %5, %5 : vector<32x512xf32>
    %cst_8 = arith.constant dense<0.000000e+00> : vector<512xf32>
    %9 = vector.multi_reduction <add>, %8, %cst_8 [0] : vector<32x512xf32> to vector<512xf32>
    %10 = vector.shape_cast %9 : vector<512xf32> to vector<1x512xf32>
    %cst_9 = arith.constant 2.000000e+00 : f32
    %11 = vector.broadcast %cst_9 : f32 to vector<64x512xf32>
    %12 = arith.mulf %11, %7 : vector<64x512xf32>
    %13 = vector.broadcast %10 : vector<1x512xf32> to vector<64x512xf32>
    %14 = arith.subf %13, %12 : vector<64x512xf32>
    %c0_10 = arith.constant 0 : index
    %c0_11 = arith.constant 0 : index
    %15 = vector.load %arg5[%c0_10, %c0_11] : memref<64x1xf32, #tpu.memory_space<vmem>>, vector<64x1xf32>
    %16 = vector.broadcast %15 : vector<64x1xf32> to vector<64x512xf32>
    %17 = arith.addf %14, %16 : vector<64x512xf32>
    %cst_12 = arith.constant dense<0x7F800000> : vector<512xf32>
    %18 = vector.multi_reduction <minimumf>, %17, %cst_12 [0] : vector<64x512xf32> to vector<512xf32>
    %19 = vector.shape_cast %18 : vector<512xf32> to vector<1x512xf32>
    %20 = tpu.iota {dimensions = array<i32: 0>} : vector<64x512xi32>
    %21 = vector.broadcast %19 : vector<1x512xf32> to vector<64x512xf32>
    %22 = arith.cmpf ole, %17, %21 : vector<64x512xf32>
    %c64_i32 = arith.constant 64 : i32
    %23 = vector.broadcast %c64_i32 : i32 to vector<64x512xi32>
    %24 = arith.select %22, %20, %23 : vector<64x512xi1>, vector<64x512xi32>
    %cst_13 = arith.constant dense<2147483647> : vector<512xi32>
    %25 = vector.multi_reduction <minsi>, %24, %cst_13 [0] : vector<64x512xi32> to vector<512xi32>
    %26 = vector.shape_cast %25 : vector<512xi32> to vector<1x512xi32>
    %c0_14 = arith.constant 0 : index
    %c0_15 = arith.constant 0 : index
    %27 = vector.load %arg9[%c0_14, %c0_15] : memref<1x512xi32, #tpu.memory_space<vmem>>, vector<1x512xi32>
    tpu.vector_store %arg9[%c0_14, %c0_15], %26 {strides = array<i32>} : memref<1x512xi32, #tpu.memory_space<vmem>>, vector<1x512xi32>,
    %28 = vector.broadcast %26 : vector<1x512xi32> to vector<64x512xi32>
    %29 = arith.cmpi eq, %20, %28 : vector<64x512xi32>
    %30 = arith.extui %29 : vector<64x512xi1> to vector<64x512xi32>
    %31 = arith.sitofp %30 : vector<64x512xi32> to vector<64x512xf32>
    %c0_16 = arith.constant 0 : index
    %c0_17 = arith.constant 0 : index
    %32 = vector.load %arg6[%c0_16, %c0_17] : memref<4x64xf32, #tpu.memory_space<vmem>>, vector<4x64xf32>
    %cst_18 = arith.constant dense<0.000000e+00> : vector<4x512xf32>
    %33 = tpu.matmul %32, %31, %cst_18 {dimension_numbers = #tpu.dot_dimension_numbers<[1], [0], [0], [1], [0, 0, 1, 1], [], []>} : vector<4x64xf32>, vector<64x512xf32>, vector<4x512xf32> -> vector<4x512xf32>
    %c0_19 = arith.constant 0 : index
    %c0_20 = arith.constant 0 : index
    %34 = vector.load %arg7[%c0_19, %c0_20] : memref<4x1xf32, #tpu.memory_space<vmem>>, vector<4x1xf32>
    %35 = vector.broadcast %34 : vector<4x1xf32> to vector<4x512xf32>
    %36 = arith.addf %33, %35 : vector<4x512xf32>
    %c0_21 = arith.constant 0 : index
    %c0_22 = arith.constant 0 : index
    %37 = vector.load %arg8[%c0_21, %c0_22] : memref<4x512xf32, #tpu.memory_space<vmem>>, vector<4x512xf32>
    tpu.vector_store %arg8[%c0_21, %c0_22], %36 {strides = array<i32>} : memref<4x512xf32, #tpu.memory_space<vmem>>, vector<4x512xf32>,
    %c512_i32 = arith.constant 512 : i32
    %38 = arith.muli %arg0, %c512_i32 : i32
    %39 = tpu.iota {dimensions = array<i32: 1>} : vector<1x512xi32>
    %40 = vector.broadcast %38 : i32 to vector<1x512xi32>
    %41 = arith.addi %40, %39 : vector<1x512xi32>
    %c512_i32_23 = arith.constant 512 : i32
    %42 = vector.broadcast %c512_i32_23 : i32 to vector<1x512xi32>
    %43 = arith.cmpi slt, %41, %42 : vector<1x512xi32>
    %44 = vector.extract_strided_slice %0 {offsets = [0, 0], sizes = [4, 512], strides = [1, 1]} : vector<8x512xf32> to vector<4x512xf32>
    %45 = arith.subf %36, %44 : vector<4x512xf32>
    %46 = arith.mulf %45, %45 : vector<4x512xf32>
    %cst_24 = arith.constant dense<0.000000e+00> : vector<512xf32>
    %47 = vector.multi_reduction <add>, %46, %cst_24 [0] : vector<4x512xf32> to vector<512xf32>
    %48 = vector.shape_cast %47 : vector<512xf32> to vector<1x512xf32>
    %cst_25 = arith.constant 0.000000e+00 : f32
    %49 = vector.broadcast %cst_25 : f32 to vector<1x512xf32>
    %50 = arith.select %43, %48, %49 : vector<1x512xi1>, vector<1x512xf32>
    %51 = vector.shape_cast %50 : vector<1x512xf32> to vector<1x1x512xf32>
    %cst_26 = arith.constant dense<0.000000e+00> : vector<1xf32>
    %52 = vector.multi_reduction <add>, %51, %cst_26 [1, 2] : vector<1x1x512xf32> to vector<1xf32>
    %53 = vector.shape_cast %52 : vector<1xf32> to vector<1x1x1xf32>
    %54 = vector.extract %53[0, 0, 0] : f32 from vector<1x1x1xf32>
    %cst_27 = arith.constant 0.000000e+00 : f32
    %55 = vector.broadcast %cst_27 : f32 to vector<1x512xf32>
    %56 = arith.maximumf %19, %55 : vector<1x512xf32>
    %cst_28 = arith.constant 0.000000e+00 : f32
    %57 = vector.broadcast %cst_28 : f32 to vector<1x512xf32>
    %58 = arith.select %43, %56, %57 : vector<1x512xi1>, vector<1x512xf32>
    %59 = vector.shape_cast %58 : vector<1x512xf32> to vector<1x1x512xf32>
    %cst_29 = arith.constant dense<0.000000e+00> : vector<1xf32>
    %60 = vector.multi_reduction <add>, %59, %cst_29 [1, 2] : vector<1x1x512xf32> to vector<1xf32>
    %61 = vector.shape_cast %60 : vector<1xf32> to vector<1x1x1xf32>
    %62 = vector.extract %61[0, 0, 0] : f32 from vector<1x1x1xf32>
    %63 = tpu.iota {dimensions = array<i32: 2>} : vector<1x1x128xi32>
    %c0_i32 = arith.constant 0 : i32
    %64 = vector.broadcast %c0_i32 : i32 to vector<1x1x128xi32>
    %65 = arith.cmpi eq, %63, %64 : vector<1x1x128xi32>
    %c1_i32 = arith.constant 1 : i32
    %66 = vector.broadcast %c1_i32 : i32 to vector<1x1x128xi32>
    %67 = arith.cmpi eq, %63, %66 : vector<1x1x128xi32>
    %cst_30 = arith.constant 0.000000e+00 : f32
    %68 = vector.broadcast %62 : f32 to vector<1x1x128xf32>
    %69 = vector.broadcast %cst_30 : f32 to vector<1x1x128xf32>
    %70 = arith.select %67, %68, %69 : vector<1x1x128xi1>, vector<1x1x128xf32>
    %71 = vector.broadcast %54 : f32 to vector<1x1x128xf32>
    %72 = arith.select %65, %71, %70 : vector<1x1x128xi1>, vector<1x1x128xf32>
    %c0_31 = arith.constant 0 : index
    %c0_32 = arith.constant 0 : index
    %c0_33 = arith.constant 0 : index
    %73 = vector.load %arg10[%c0_31, %c0_32, %c0_33] : memref<1x1x128xf32, #tpu.memory_space<vmem>>, vector<1x1x128xf32>
    tpu.vector_store %arg10[%c0_31, %c0_32, %c0_33], %72 {strides = array<i32>} : memref<1x1x128xf32, #tpu.memory_space<vmem>>, vector<1x1x128xf32>,
    return
  }
  func.func @transform_0(%arg0: i32) -> (i32, i32) {
    %c0_i32 = arith.constant 0 : i32
    %c0_i32_0 = arith.constant 0 : i32
    return %c0_i32, %arg0 : i32, i32
  }
  func.func @transform_1(%arg0: i32) -> (i32, i32) {
    %c0_i32 = arith.constant 0 : i32
    %c0_i32_0 = arith.constant 0 : i32
    %c0_i32_1 = arith.constant 0 : i32
    return %c0_i32, %c0_i32_0 : i32, i32
  }
  func.func @transform_2(%arg0: i32) -> (i32, i32) {
    %c0_i32 = arith.constant 0 : i32
    %c0_i32_0 = arith.constant 0 : i32
    %c0_i32_1 = arith.constant 0 : i32
    return %c0_i32, %c0_i32_0 : i32, i32
  }
  func.func @transform_3(%arg0: i32) -> (i32, i32) {
    %c0_i32 = arith.constant 0 : i32
    %c0_i32_0 = arith.constant 0 : i32
    %c0_i32_1 = arith.constant 0 : i32
    return %c0_i32, %c0_i32_0 : i32, i32
  }
  func.func @transform_4(%arg0: i32) -> (i32, i32) {
    %c0_i32 = arith.constant 0 : i32
    %c0_i32_0 = arith.constant 0 : i32
    %c0_i32_1 = arith.constant 0 : i32
    return %c0_i32, %c0_i32_0 : i32, i32
  }
  func.func @transform_5(%arg0: i32) -> (i32, i32) {
    %c0_i32 = arith.constant 0 : i32
    %c0_i32_0 = arith.constant 0 : i32
    %c0_i32_1 = arith.constant 0 : i32
    return %c0_i32, %c0_i32_0 : i32, i32
  }
  func.func @transform_6(%arg0: i32) -> (i32, i32) {
    %c0_i32 = arith.constant 0 : i32
    %c0_i32_0 = arith.constant 0 : i32
    %c0_i32_1 = arith.constant 0 : i32
    return %c0_i32, %c0_i32_0 : i32, i32
  }
  func.func @transform_7(%arg0: i32) -> (i32, i32) {
    %c0_i32 = arith.constant 0 : i32
    %c0_i32_0 = arith.constant 0 : i32
    return %c0_i32, %arg0 : i32, i32
  }
  func.func @transform_8(%arg0: i32) -> (i32, i32) {
    %c0_i32 = arith.constant 0 : i32
    %c0_i32_0 = arith.constant 0 : i32
    return %c0_i32, %arg0 : i32, i32
  }
  func.func @transform_9(%arg0: i32) -> (i32, i32, i32) {
    %c0_i32 = arith.constant 0 : i32
    %c0_i32_0 = arith.constant 0 : i32
    %c0_i32_1 = arith.constant 0 : i32
    return %arg0, %c0_i32, %c0_i32_0 : i32, i32, i32
  }
}

</mosaic_0001>

<llo_original>
// kernel: tpu_custom_call.1
$region0: #{tpu_custom_call.1}
  #allocation0 [shape = 'u32[]', space=smem, size = 0x4, offset = 0x4, fixed_abs, tag = 'smem constant byte address 0x4 - core index']
  #allocation1 [shape = 'u32[144,128]{1,0:T(1,128)}', space=vmem, size = 0x12000, scoped, tag = 'internal scratch']
  %s0 = inlined_call_operand.vmem [shape: f32[8,512], index: 0, kind: input, shape index: {}]
  %s1 = inlined_call_operand.vmem [shape: f32[32,8], index: 1, kind: input, shape index: {}]
  %s2 = inlined_call_operand.vmem [shape: f32[32,1], index: 2, kind: input, shape index: {}]
  %s3 = inlined_call_operand.vmem [shape: f32[64,32], index: 3, kind: input, shape index: {}]
  %s4 = inlined_call_operand.vmem [shape: f32[64,1], index: 4, kind: input, shape index: {}]
  %s5 = inlined_call_operand.vmem [shape: f32[4,64], index: 5, kind: input, shape index: {}]
  %s6 = inlined_call_operand.vmem [shape: f32[4,1], index: 6, kind: input, shape index: {}]
  %s7 = inlined_call_operand.hbm [shape: f32[4,512], index: 7, kind: output, shape index: {0}]
  %s8 = inlined_call_operand.hbm [shape: s32[1,512], index: 8, kind: output, shape index: {1}]
  %s9 = inlined_call_operand.hbm [shape: f32[1,1,128], index: 9, kind: output, shape index: {2}]
  %10 = xla_tuple %s7, %s8, %s9
  %s11 = sld [smem:[#allocation0]]
  $region54: #{tpu_custom_call.1} parent=0
    _
  %s13 = ssub.s32 1, %s11
  %s14 = scalar_select 0, %s13, %s11
  $region1: #{tpu_custom_call.1} parent=0
    #allocation2 [shape = 'u8[8192]{0}', space=vmem, size = 0x2000, scoped, tag = 'output window, operand 0, single buffered']
    #allocation3 [shape = 's32[1]{0}', space=sflag, size = 0x4, scoped, tag = 'scoped memory for tpu_custom_call.1']
    #allocation4 [shape = 'u8[2048]{0}', space=vmem, size = 0x800, scoped, tag = 'output window, operand 1, single buffered']
    #allocation5 [shape = 's32[1]{0}', space=sflag, size = 0x4, scoped, tag = 'scoped memory for tpu_custom_call.1']
    #allocation6 [shape = 'u8[512]{0}', space=vmem, size = 0x400, scoped, tag = 'output window, operand 2, single buffered']
    %15 = vsyncpa [#allocation3], 0
    %16 = vsyncpa [#allocation5], 0
    // Predicated region
    $region2: #{tpu_custom_call.1} parent=1 // pred_check
      _
    $region3: #{tpu_custom_call.1} parent=1 // pred_check_branch
      %18 = sbr.rel (0) target = $region5
    $region4: #{tpu_custom_call.1} parent=1 // pred_region
      _
    $region5: #{tpu_custom_call.1} parent=1 // pred_fallthru
      _
    // Predicated region
    $region6: #{tpu_custom_call.1} parent=1 // pred_check
      _
    $region7: #{tpu_custom_call.1} parent=1 // pred_check_branch
      %20 = sbr.rel (0) target = $region9
    $region8: #{tpu_custom_call.1} parent=1 // pred_region
      _
    $region9: #{tpu_custom_call.1} parent=1 // pred_fallthru
      _
    // Predicated region
    $region10: #{tpu_custom_call.1} parent=1 // pred_check
      _
    $region11: #{tpu_custom_call.1} parent=1 // pred_check_branch
      %22 = sbr.rel (0) target = $region13
    $region12: #{tpu_custom_call.1} parent=1 // pred_region
      _
    $region13: #{tpu_custom_call.1} parent=1 // pred_fallthru
      _
    // Predicated region
    $region14: #{tpu_custom_call.1} parent=1 // pred_check
      _
    $region15: #{tpu_custom_call.1} parent=1 // pred_check_branch
      %24 = sbr.rel (0) target = $region17
    $region16: #{tpu_custom_call.1} parent=1 // pred_region
      _
    $region17: #{tpu_custom_call.1} parent=1 // pred_fallthru
      _
    // Predicated region
    $region18: #{tpu_custom_call.1} parent=1 // pred_check
      _
    $region19: #{tpu_custom_call.1} parent=1 // pred_check_branch
      %26 = sbr.rel (0) target = $region21
    $region20: #{tpu_custom_call.1} parent=1 // pred_region
      _
    $region21: #{tpu_custom_call.1} parent=1 // pred_fallthru
      _
    // Predicated region
    $region22: #{tpu_custom_call.1} parent=1 // pred_check
      _
    $region23: #{tpu_custom_call.1} parent=1 // pred_check_branch
      %28 = sbr.rel (0) target = $region25
    $region24: #{tpu_custom_call.1} parent=1 // pred_region
      _
    $region25: #{tpu_custom_call.1} parent=1 // pred_fallthru
      _
    // Predicated region
    $region26: #{tpu_custom_call.1} parent=1 // pred_check
      _
    $region27: #{tpu_custom_call.1} parent=1 // pred_check_branch
      %30 = sbr.rel (0) target = $region29
    $region28: #{tpu_custom_call.1} parent=1 // pred_region
      _
    $region29: #{tpu_custom_call.1} parent=1 // pred_fallthru
      _
    %v31 = vld [vmem:[%s0] sm:$0xff]
    %v32 = vld [vmem:[%s0 + $0x8] sm:$0xff]
    %v33 = vld [vmem:[%s0 + $0x10] sm:$0xff]
    %v34 = vld [vmem:[%s0 + $0x18] sm:$0xff]
    %v35 = vld [vmem:[%s1] sm:$0xff]
    %v36 = vld [vmem:[%s1 + $0x8] sm:$0xff]
    %v37 = vld [vmem:[%s1 + $0x10] sm:$0xff]
    %v38 = vld [vmem:[%s1 + $0x18] sm:$0xff]
    %v39 = vld [vmem:[%s2] sm:$0xff]
    %v40 = vld [vmem:[%s2 + $0x8] sm:$0xff]
    %v41 = vld [vmem:[%s2 + $0x10] sm:$0xff]
    %v42 = vld [vmem:[%s2 + $0x18] sm:$0xff]
    %44 = vset.pattern.permute.xlu0 0
    %45 = vperm.xlu0 %44, %v39
    %v46 = vpop.permute.xlu0 %45
    %49 = vset.pattern.permute.xlu0 0
    %50 = vperm.xlu0 %49, %v40
    %v51 = vpop.permute.xlu0 %50
    %54 = vset.pattern.permute.xlu0 0
    %55 = vperm.xlu0 %54, %v41
    %v56 = vpop.permute.xlu0 %55
    %59 = vset.pattern.permute.xlu0 0
    %60 = vperm.xlu0 %59, %v42
    %v61 = vpop.permute.xlu0 %60
    %vm63 = vcmask 64512
    %v65 = vsel %vm63, %v35, 0
    %v68 = vsel %vm63, %v36, 0
    %v71 = vsel %vm63, %v37, 0
    %v74 = vsel %vm63, %v38, 0
    %76 = vmatprep.subr.mxu0 %v32
    %77 = vmatpush1.msra.mxu0 %v31
    %78 = vmatprep.subr.mxu0 0.0
    %79 = vmatpush1.msra.mxu0 0.0
    %80 = vmatprep.subr.mxu0 0.0
    %81 = vmatpush1.msra.mxu0 0.0
    %82 = vmatprep.subr.mxu0 0.0
    %83 = vmatpush1.msra.mxu0 0.0
    %84 = vmatprep.subr.mxu0 0.0
    %85 = vmatpush1.msra.mxu0 0.0
    %86 = vmatprep.subr.mxu0 0.0
    %87 = vmatpush1.msra.mxu0 0.0
    %88 = vmatprep.subr.mxu0 0.0
    %89 = vmatpush1.msra.mxu0 0.0
    %90 = vmatprep.subr.mxu0 0.0
    %91 = vmatpush1.msra.mxu0 0.0
    %92 = vmatprep.subr.mxu0 0.0
    %93 = vmatpush1.msra.mxu0 0.0
    %94 = vmatprep.subr.mxu0 0.0
    %95 = vmatpush1.msra.mxu0 0.0
    %96 = vmatprep.subr.mxu0 0.0
    %97 = vmatpush1.msra.mxu0 0.0
    %98 = vmatprep.subr.mxu0 0.0
    %99 = vmatpush1.msra.mxu0 0.0
    %100 = vmatprep.subr.mxu0 0.0
    %101 = vmatpush1.msra.mxu0 0.0
    %102 = vmatprep.subr.mxu0 0.0
    %103 = vmatpush1.msra.mxu0 0.0
    %104 = vmatprep.subr.mxu0 0.0
    %105 = vmatpush1.msra.mxu0 0.0
    %106 = vmatprep.subr.mxu0 0.0
    %107 = vmatpush1.msra.mxu0 0.0
    %108 = vmatprep.subr.mxu0 0.0
    %109 = vmatpush1.msra.mxu0 0.0
    %110 = vmatprep.subr.mxu0 0.0
    %111 = vmatpush1.msra.mxu0 0.0
    %112 = vmatprep.subr.mxu0 0.0
    %113 = vmatpush1.msra.mxu0 0.0
    %114 = vmatprep.subr.mxu0 0.0
    %115 = vmatpush1.msra.mxu0 0.0
    %116 = vmatprep.subr.mxu0 0.0
    %117 = vmatpush1.msra.mxu0 0.0
    %118 = vmatprep.subr.mxu0 0.0
    %119 = vmatpush1.msra.mxu0 0.0
    %120 = vmatprep.subr.mxu0 0.0
    %121 = vmatpush1.msra.mxu0 0.0
    %122 = vmatprep.subr.mxu0 0.0
    %123 = vmatpush1.msra.mxu0 0.0
    %124 = vmatprep.subr.mxu0 0.0
    %125 = vmatpush1.msra.mxu0 0.0
    %126 = vmatprep.subr.mxu0 0.0
    %127 = vmatpush1.msra.mxu0 0.0
    %128 = vmatprep.subr.mxu0 0.0
    %129 = vmatpush1.msra.mxu0 0.0
    %130 = vmatprep.subr.mxu0 0.0
    %131 = vmatpush1.msra.mxu0 0.0
    %132 = vmatprep.subr.mxu0 0.0
    %133 = vmatpush1.msra.mxu0 0.0
    %134 = vmatprep.subr.mxu0 0.0
    %135 = vmatpush1.msra.mxu0 0.0
    %136 = vmatprep.subr.mxu0 0.0
    %137 = vmatpush1.msra.mxu0 0.0
    %138 = vmatprep.subr.mxu0 0.0
    %139 = vmatpush1.msra.mxu0 0.0
    %140 = vmatprep.mubr.f32.mxu0 0.0
    %141 = vmatmul.mubr.f32.gmra.mrb[0].mxu0 %v65
    %v142 = vpop.f32.mrb[0].mxu0
    %v143 = vadd.f32 %v46, %v142
    %v144 = vpop.f32.mrb[0].mxu0
    %v145 = vadd.f32 %v46, %v144
    %146 = vmatprep.mubr.f32.mxu0 0.0
    %147 = vmatmul.mubr.f32.gmra.mrb[0].mxu0 %v68
    %v148 = vpop.f32.mrb[0].mxu0
    %v149 = vadd.f32 %v51, %v148
    %v150 = vpop.f32.mrb[0].mxu0
    %v151 = vadd.f32 %v51, %v150
    %152 = vmatprep.mubr.f32.mxu0 0.0
    %153 = vmatmul.mubr.f32.gmra.mrb[0].mxu0 %v71
    %v154 = vpop.f32.mrb[0].mxu0
    %v155 = vadd.f32 %v56, %v154
    %v156 = vpop.f32.mrb[0].mxu0
    %v157 = vadd.f32 %v56, %v156
    %158 = vmatprep.mubr.f32.mxu0 0.0
    %159 = vmatmul.mubr.f32.gmra.mrb[0].mxu0 %v74
    %v160 = vpop.f32.mrb[0].mxu0
    %v161 = vadd.f32 %v61, %v160
    %v162 = vpop.f32.mrb[0].mxu0
    %v163 = vadd.f32 %v61, %v162
    %164 = vdwg.mxu0
    %165 = vmatprep.subr.mxu0 %v34
    %166 = vmatpush1.msra.mxu0 %v33
    %167 = vmatprep.subr.mxu0 0.0
    %168 = vmatpush1.msra.mxu0 0.0
    %169 = vmatprep.subr.mxu0 0.0
    %170 = vmatpush1.msra.mxu0 0.0
    %171 = vmatprep.subr.mxu0 0.0
    %172 = vmatpush1.msra.mxu0 0.0
    %173 = vmatprep.subr.mxu0 0.0
    %174 = vmatpush1.msra.mxu0 0.0
    %175 = vmatprep.subr.mxu0 0.0
    %176 = vmatpush1.msra.mxu0 0.0
    %177 = vmatprep.subr.mxu0 0.0
    %178 = vmatpush1.msra.mxu0 0.0
    %179 = vmatprep.subr.mxu0 0.0
    %180 = vmatpush1.msra.mxu0 0.0
    %181 = vmatprep.subr.mxu0 0.0
    %182 = vmatpush1.msra.mxu0 0.0
    %183 = vmatprep.subr.mxu0 0.0
    %184 = vmatpush1.msra.mxu0 0.0
    %185 = vmatprep.subr.mxu0 0.0
    %186 = vmatpush1.msra.mxu0 0.0
    %187 = vmatprep.subr.mxu0 0.0
    %188 = vmatpush1.msra.mxu0 0.0
    %189 = vmatprep.subr.mxu0 0.0
    %190 = vmatpush1.msra.mxu0 0.0
    %191 = vmatprep.subr.mxu0 0.0
    %192 = vmatpush1.msra.mxu0 0.0
    %193 = vmatprep.subr.mxu0 0.0
    %194 = vmatpush1.msra.mxu0 0.0
    %195 = vmatprep.subr.mxu0 0.0
    %196 = vmatpush1.msra.mxu0 0.0
    %197 = vmatprep.subr.mxu0 0.0
    %198 = vmatpush1.msra.mxu0 0.0
    %199 = vmatprep.subr.mxu0 0.0
    %200 = vmatpush1.msra.mxu0 0.0
    %201 = vmatprep.subr.mxu0 0.0
    %202 = vmatpush1.msra.mxu0 0.0
    %203 = vmatprep.subr.mxu0 0.0
    %204 = vmatpush1.msra.mxu0 0.0
    %205 = vmatprep.subr.mxu0 0.0
    %206 = vmatpush1.msra.mxu0 0.0
    %207 = vmatprep.subr.mxu0 0.0
    %208 = vmatpush1.msra.mxu0 0.0
    %209 = vmatprep.subr.mxu0 0.0
    %210 = vmatpush1.msra.mxu0 0.0
    %211 = vmatprep.subr.mxu0 0.0
    %212 = vmatpush1.msra.mxu0 0.0
    %213 = vmatprep.subr.mxu0 0.0
    %214 = vmatpush1.msra.mxu0 0.0
    %215 = vmatprep.subr.mxu0 0.0
    %216 = vmatpush1.msra.mxu0 0.0
    %217 = vmatprep.subr.mxu0 0.0
    %218 = vmatpush1.msra.mxu0 0.0
    %219 = vmatprep.subr.mxu0 0.0
    %220 = vmatpush1.msra.mxu0 0.0
    %221 = vmatprep.subr.mxu0 0.0
    %222 = vmatpush1.msra.mxu0 0.0
    %223 = vmatprep.subr.mxu0 0.0
    %224 = vmatpush1.msra.mxu0 0.0
    %225 = vmatprep.subr.mxu0 0.0
    %226 = vmatpush1.msra.mxu0 0.0
    %227 = vmatprep.subr.mxu0 0.0
    %228 = vmatpush1.msra.mxu0 0.0
    %229 = vmatprep.mubr.f32.mxu0 0.0
    %230 = vmatmul.mubr.f32.gmra.mrb[0].mxu0 %v65
    %v231 = vpop.f32.mrb[0].mxu0
    %v232 = vadd.f32 %v46, %v231
    %v233 = vpop.f32.mrb[0].mxu0
    %v234 = vadd.f32 %v46, %v233
    %235 = vmatprep.mubr.f32.mxu0 0.0
    %236 = vmatmul.mubr.f32.gmra.mrb[0].mxu0 %v68
    %v237 = vpop.f32.mrb[0].mxu0
    %v238 = vadd.f32 %v51, %v237
    %v239 = vpop.f32.mrb[0].mxu0
    %v240 = vadd.f32 %v51, %v239
    %241 = vmatprep.mubr.f32.mxu0 0.0
    %242 = vmatmul.mubr.f32.gmra.mrb[0].mxu0 %v71
    %v243 = vpop.f32.mrb[0].mxu0
    %v244 = vadd.f32 %v56, %v243
    %v245 = vpop.f32.mrb[0].mxu0
    %v246 = vadd.f32 %v56, %v245
    %247 = vmatprep.mubr.f32.mxu0 0.0
    %248 = vmatmul.mubr.f32.gmra.mrb[0].mxu0 %v74
    %v249 = vpop.f32.mrb[0].mxu0
    %v250 = vadd.f32 %v61, %v249
    %v251 = vpop.f32.mrb[0].mxu0
    %v252 = vadd.f32 %v61, %v251
    %253 = vdwg.mxu0
    %v254 = vld [vmem:[%s3] sm:$0xff]
    %v255 = vld [vmem:[%s3 + $0x8] sm:$0xff]
    %v256 = vld [vmem:[%s3 + $0x10] sm:$0xff]
    %v257 = vld [vmem:[%s3 + $0x18] sm:$0xff]
    %v258 = vld [vmem:[%s3 + $0x20] sm:$0xff]
    %v259 = vld [vmem:[%s3 + $0x28] sm:$0xff]
    %v260 = vld [vmem:[%s3 + $0x30] sm:$0xff]
    %v261 = vld [vmem:[%s3 + $0x38] sm:$0xff]
    %vm262 = vcmask 261120
    %v264 = vsel %vm262, %v254, 0
    %v267 = vsel %vm262, %v255, 0
    %v270 = vsel %vm262, %v256, 0
    %v273 = vsel %vm262, %v257, 0
    %v276 = vsel %vm262, %v258, 0
    %v279 = vsel %vm262, %v259, 0
    %v282 = vsel %vm262, %v260, 0
    %v285 = vsel %vm262, %v261, 0
    %287 = vmatprep.subr.mxu0 %v145
    %288 = vmatpush1.msra.mxu0 %v143
    %289 = vmatprep.subr.mxu0 %v151
    %290 = vmatpush1.msra.mxu0 %v149
    %291 = vmatprep.subr.mxu0 %v157
    %292 = vmatpush1.msra.mxu0 %v155
    %293 = vmatprep.subr.mxu0 %v163
    %294 = vmatpush1.msra.mxu0 %v161
    %295 = vmatprep.subr.mxu0 0.0
    %296 = vmatpush1.msra.mxu0 0.0
    %297 = vmatprep.subr.mxu0 0.0
    %298 = vmatpush1.msra.mxu0 0.0
    %299 = vmatprep.subr.mxu0 0.0
    %300 = vmatpush1.msra.mxu0 0.0
    %301 = vmatprep.subr.mxu0 0.0
    %302 = vmatpush1.msra.mxu0 0.0
    %303 = vmatprep.subr.mxu0 0.0
    %304 = vmatpush1.msra.mxu0 0.0
    %305 = vmatprep.subr.mxu0 0.0
    %306 = vmatpush1.msra.mxu0 0.0
    %307 = vmatprep.subr.mxu0 0.0
    %308 = vmatpush1.msra.mxu0 0.0
    %309 = vmatprep.subr.mxu0 0.0
    %310 = vmatpush1.msra.mxu0 0.0
    %311 = vmatprep.subr.mxu0 0.0
    %312 = vmatpush1.msra.mxu0 0.0
    %313 = vmatprep.subr.mxu0 0.0
    %314 = vmatpush1.msra.mxu0 0.0
    %315 = vmatprep.subr.mxu0 0.0
    %316 = vmatpush1.msra.mxu0 0.0
    %317 = vmatprep.subr.mxu0 0.0
    %318 = vmatpush1.msra.mxu0 0.0
    %319 = vmatprep.subr.mxu0 0.0
    %320 = vmatpush1.msra.mxu0 0.0
    %321 = vmatprep.subr.mxu0 0.0
    %322 = vmatpush1.msra.mxu0 0.0
    %323 = vmatprep.subr.mxu0 0.0
    %324 = vmatpush1.msra.mxu0 0.0
    %325 = vmatprep.subr.mxu0 0.0
    %326 = vmatpush1.msra.mxu0 0.0
    %327 = vmatprep.subr.mxu0 0.0
    %328 = vmatpush1.msra.mxu0 0.0
    %329 = vmatprep.subr.mxu0 0.0
    %330 = vmatpush1.msra.mxu0 0.0
    %331 = vmatprep.subr.mxu0 0.0
    %332 = vmatpush1.msra.mxu0 0.0
    %333 = vmatprep.subr.mxu0 0.0
    %334 = vmatpush1.msra.mxu0 0.0
    %335 = vmatprep.subr.mxu0 0.0
    %336 = vmatpush1.msra.mxu0 0.0
    %337 = vmatprep.subr.mxu0 0.0
    %338 = vmatpush1.msra.mxu0 0.0
    %339 = vmatprep.subr.mxu0 0.0
    %340 = vmatpush1.msra.mxu0 0.0
    %341 = vmatprep.subr.mxu0 0.0
    %342 = vmatpush1.msra.mxu0 0.0
    %343 = vmatprep.subr.mxu0 0.0
    %344 = vmatpush1.msra.mxu0 0.0
    %345 = vmatprep.subr.mxu0 0.0
    %346 = vmatpush1.msra.mxu0 0.0
    %347 = vmatprep.subr.mxu0 0.0
    %348 = vmatpush1.msra.mxu0 0.0
    %349 = vmatprep.subr.mxu0 0.0
    %350 = vmatpush1.msra.mxu0 0.0
    %351 = vmatprep.mubr.f32.mxu0 0.0
    %352 = vmatmul.mubr.f32.gmra.mrb[0].mxu0 %v264
    %v353 = vpop.f32.mrb[0].mxu0
    %v354 = vadd.f32 0.0, %v353
    %v355 = vpop.f32.mrb[0].mxu0
    %v356 = vadd.f32 0.0, %v355
    %357 = vmatprep.mubr.f32.mxu0 0.0
    %358 = vmatmul.mubr.f32.gmra.mrb[0].mxu0 %v267
    %v359 = vpop.f32.mrb[0].mxu0
    %v360 = vadd.f32 0.0, %v359
    %v361 = vpop.f32.mrb[0].mxu0
    %v362 = vadd.f32 0.0, %v361
    %363 = vmatprep.mubr.f32.mxu0 0.0
    %364 = vmatmul.mubr.f32.gmra.mrb[0].mxu0 %v270
    %v365 = vpop.f32.mrb[0].mxu0
    %v366 = vadd.f32 0.0, %v365
    %v367 = vpop.f32.mrb[0].mxu0
    %v368 = vadd.f32 0.0, %v367
    %369 = vmatprep.mubr.f32.mxu0 0.0
    %370 = vmatmul.mubr.f32.gmra.mrb[0].mxu0 %v273
    %v371 = vpop.f32.mrb[0].mxu0
    %v372 = vadd.f32 0.0, %v371
    %v373 = vpop.f32.mrb[0].mxu0
    %v374 = vadd.f32 0.0, %v373
    %375 = vmatprep.mubr.f32.mxu0 0.0
    %376 = vmatmul.mubr.f32.gmra.mrb[0].mxu0 %v276
    %v377 = vpop.f32.mrb[0].mxu0
    %v378 = vadd.f32 0.0, %v377
    %v379 = vpop.f32.mrb[0].mxu0
    %v380 = vadd.f32 0.0, %v379
    %381 = vmatprep.mubr.f32.mxu0 0.0
    %382 = vmatmul.mubr.f32.gmra.mrb[0].mxu0 %v279
    %v383 = vpop.f32.mrb[0].mxu0
    %v384 = vadd.f32 0.0, %v383
    %v385 = vpop.f32.mrb[0].mxu0
    %v386 = vadd.f32 0.0, %v385
    %387 = vmatprep.mubr.f32.mxu0 0.0
    %388 = vmatmul.mubr.f32.gmra.mrb[0].mxu0 %v282
    %v389 = vpop.f32.mrb[0].mxu0
    %v390 = vadd.f32 0.0, %v389
    %v391 = vpop.f32.mrb[0].mxu0
    %v392 = vadd.f32 0.0, %v391
    %393 = vmatprep.mubr.f32.mxu0 0.0
    %394 = vmatmul.mubr.f32.gmra.mrb[0].mxu0 %v285
    %v395 = vpop.f32.mrb[0].mxu0
    %v396 = vadd.f32 0.0, %v395
    %v397 = vpop.f32.mrb[0].mxu0
    %v398 = vadd.f32 0.0, %v397
    %399 = vdwg.mxu0
    %400 = vmatprep.subr.mxu0 %v234
    %401 = vmatpush1.msra.mxu0 %v232
    %402 = vmatprep.subr.mxu0 %v240
    %403 = vmatpush1.msra.mxu0 %v238
    %404 = vmatprep.subr.mxu0 %v246
    %405 = vmatpush1.msra.mxu0 %v244
    %406 = vmatprep.subr.mxu0 %v252
    %407 = vmatpush1.msra.mxu0 %v250
    %408 = vmatprep.subr.mxu0 0.0
    %409 = vmatpush1.msra.mxu0 0.0
    %410 = vmatprep.subr.mxu0 0.0
    %411 = vmatpush1.msra.mxu0 0.0
    %412 = vmatprep.subr.mxu0 0.0
    %413 = vmatpush1.msra.mxu0 0.0
    %414 = vmatprep.subr.mxu0 0.0
    %415 = vmatpush1.msra.mxu0 0.0
    %416 = vmatprep.subr.mxu0 0.0
    %417 = vmatpush1.msra.mxu0 0.0
    %418 = vmatprep.subr.mxu0 0.0
    %419 = vmatpush1.msra.mxu0 0.0
    %420 = vmatprep.subr.mxu0 0.0
    %421 = vmatpush1.msra.mxu0 0.0
    %422 = vmatprep.subr.mxu0 0.0
    %423 = vmatpush1.msra.mxu0 0.0
    %424 = vmatprep.subr.mxu0 0.0
    %425 = vmatpush1.msra.mxu0 0.0
    %426 = vmatprep.subr.mxu0 0.0
    %427 = vmatpush1.msra.mxu0 0.0
    %428 = vmatprep.subr.mxu0 0.0
    %429 = vmatpush1.msra.mxu0 0.0
    %430 = vmatprep.subr.mxu0 0.0
    %431 = vmatpush1.msra.mxu0 0.0
    %432 = vmatprep.subr.mxu0 0.0
    %433 = vmatpush1.msra.mxu0 0.0
    %434 = vmatprep.subr.mxu0 0.0
    %435 = vmatpush1.msra.mxu0 0.0
    %436 = vmatprep.subr.mxu0 0.0
    %437 = vmatpush1.msra.mxu0 0.0
    %438 = vmatprep.subr.mxu0 0.0
    %439 = vmatpush1.msra.mxu0 0.0
    %440 = vmatprep.subr.mxu0 0.0
    %441 = vmatpush1.msra.mxu0 0.0
    %442 = vmatprep.subr.mxu0 0.0
    %443 = vmatpush1.msra.mxu0 0.0
    %444 = vmatprep.subr.mxu0 0.0
    %445 = vmatpush1.msra.mxu0 0.0
    %446 = vmatprep.subr.mxu0 0.0
    %447 = vmatpush1.msra.mxu0 0.0
    %448 = vmatprep.subr.mxu0 0.0
    %449 = vmatpush1.msra.mxu0 0.0
    %450 = vmatprep.subr.mxu0 0.0
    %451 = vmatpush1.msra.mxu0 0.0
    %452 = vmatprep.subr.mxu0 0.0
    %453 = vmatpush1.msra.mxu0 0.0
    %454 = vmatprep.subr.mxu0 0.0
    %455 = vmatpush1.msra.mxu0 0.0
    %456 = vmatprep.subr.mxu0 0.0
    %457 = vmatpush1.msra.mxu0 0.0
    %458 = vmatprep.subr.mxu0 0.0
    %459 = vmatpush1.msra.mxu0 0.0
    %460 = vmatprep.subr.mxu0 0.0
    %461 = vmatpush1.msra.mxu0 0.0
    %462 = vmatprep.subr.mxu0 0.0
    %463 = vmatpush1.msra.mxu0 0.0
    %464 = vmatprep.mubr.f32.mxu0 0.0
    %465 = vmatmul.mubr.f32.gmra.mrb[0].mxu0 %v264
    %v466 = vpop.f32.mrb[0].mxu0
    %v467 = vadd.f32 0.0, %v466
    %v468 = vpop.f32.mrb[0].mxu0
    %v469 = vadd.f32 0.0, %v468
    %470 = vmatprep.mubr.f32.mxu0 0.0
    %471 = vmatmul.mubr.f32.gmra.mrb[0].mxu0 %v267
    %v472 = vpop.f32.mrb[0].mxu0
    %v473 = vadd.f32 0.0, %v472
    %v474 = vpop.f32.mrb[0].mxu0
    %v475 = vadd.f32 0.0, %v474
    %476 = vmatprep.mubr.f32.mxu0 0.0
    %477 = vmatmul.mubr.f32.gmra.mrb[0].mxu0 %v270
    %v478 = vpop.f32.mrb[0].mxu0
    %v479 = vadd.f32 0.0, %v478
    %v480 = vpop.f32.mrb[0].mxu0
    %v481 = vadd.f32 0.0, %v480
    %482 = vmatprep.mubr.f32.mxu0 0.0
    %483 = vmatmul.mubr.f32.gmra.mrb[0].mxu0 %v273
    %v484 = vpop.f32.mrb[0].mxu0
    %v485 = vadd.f32 0.0, %v484
    %v486 = vpop.f32.mrb[0].mxu0
    %v487 = vadd.f32 0.0, %v486
    %488 = vmatprep.mubr.f32.mxu0 0.0
    %489 = vmatmul.mubr.f32.gmra.mrb[0].mxu0 %v276
    %v490 = vpop.f32.mrb[0].mxu0
    %v491 = vadd.f32 0.0, %v490
    %v492 = vpop.f32.mrb[0].mxu0
    %v493 = vadd.f32 0.0, %v492
    %494 = vmatprep.mubr.f32.mxu0 0.0
    %495 = vmatmul.mubr.f32.gmra.mrb[0].mxu0 %v279
    %v496 = vpop.f32.mrb[0].mxu0
    %v497 = vadd.f32 0.0, %v496
    %v498 = vpop.f32.mrb[0].mxu0
    %v499 = vadd.f32 0.0, %v498
    %500 = vmatprep.mubr.f32.mxu0 0.0
    %501 = vmatmul.mubr.f32.gmra.mrb[0].mxu0 %v282
    %v502 = vpop.f32.mrb[0].mxu0
    %v503 = vadd.f32 0.0, %v502
    %v504 = vpop.f32.mrb[0].mxu0
    %v505 = vadd.f32 0.0, %v504
    %506 = vmatprep.mubr.f32.mxu0 0.0
    %507 = vmatmul.mubr.f32.gmra.mrb[0].mxu0 %v285
    %v508 = vpop.f32.mrb[0].mxu0
    %v509 = vadd.f32 0.0, %v508
    %v510 = vpop.f32.mrb[0].mxu0
    %v511 = vadd.f32 0.0, %v510
    %512 = vdwg.mxu0
    %v513 = vmul.f32 %v143, %v143
    %v514 = vmul.f32 %v145, %v145
    %v515 = vmul.f32 %v232, %v232
    %v516 = vmul.f32 %v234, %v234
    %v517 = vmul.f32 %v149, %v149
    %v518 = vmul.f32 %v151, %v151
    %v519 = vmul.f32 %v238, %v238
    %v520 = vmul.f32 %v240, %v240
    %v521 = vmul.f32 %v155, %v155
    %v522 = vmul.f32 %v157, %v157
    %v523 = vmul.f32 %v244, %v244
    %v524 = vmul.f32 %v246, %v246
    %v525 = vmul.f32 %v161, %v161
    %v526 = vmul.f32 %v163, %v163
    %v527 = vmul.f32 %v250, %v250
    %v528 = vmul.f32 %v252, %v252
    %v529 = vadd.f32 %v513, %v517
    %v530 = vadd.f32 %v529, %v521
    %v531 = vadd.f32 %v530, %v525
    %v532 = vrot.slane %v531, 4
    %v533 = vadd.f32 %v531, %v532
    %v534 = vrot.slane %v533, 2
    %v535 = vadd.f32 %v533, %v534
    %v536 = vrot.slane %v535, 1
    %v537 = vadd.f32 %v535, %v536
    %v538 = vadd.f32 %v514, %v518
    %v539 = vadd.f32 %v538, %v522
    %v540 = vadd.f32 %v539, %v526
    %v541 = vrot.slane %v540, 4
    %v542 = vadd.f32 %v540, %v541
    %v543 = vrot.slane %v542, 2
    %v544 = vadd.f32 %v542, %v543
    %v545 = vrot.slane %v544, 1
    %v546 = vadd.f32 %v544, %v545
    %v547 = vadd.f32 %v515, %v519
    %v548 = vadd.f32 %v547, %v523
    %v549 = vadd.f32 %v548, %v527
    %v550 = vrot.slane %v549, 4
    %v551 = vadd.f32 %v549, %v550
    %v552 = vrot.slane %v551, 2
    %v553 = vadd.f32 %v551, %v552
    %v554 = vrot.slane %v553, 1
    %v555 = vadd.f32 %v553, %v554
    %v556 = vadd.f32 %v516, %v520
    %v557 = vadd.f32 %v556, %v524
    %v558 = vadd.f32 %v557, %v528
    %v559 = vrot.slane %v558, 4
    %v560 = vadd.f32 %v558, %v559
    %v561 = vrot.slane %v560, 2
    %v562 = vadd.f32 %v560, %v561
    %v563 = vrot.slane %v562, 1
    %v564 = vadd.f32 %v562, %v563
    %v565 = vmul.f32 %v354, 2.0
    %v566 = vmul.f32 %v356, 2.0
    %v567 = vmul.f32 %v467, 2.0
    %v568 = vmul.f32 %v469, 2.0
    %v569 = vmul.f32 %v360, 2.0
    %v570 = vmul.f32 %v362, 2.0
    %v571 = vmul.f32 %v473, 2.0
    %v572 = vmul.f32 %v475, 2.0
    %v573 = vmul.f32 %v366, 2.0
    %v574 = vmul.f32 %v368, 2.0
    %v575 = vmul.f32 %v479, 2.0
    %v576 = vmul.f32 %v481, 2.0
    %v577 = vmul.f32 %v372, 2.0
    %v578 = vmul.f32 %v374, 2.0
    %v579 = vmul.f32 %v485, 2.0
    %v580 = vmul.f32 %v487, 2.0
    %v581 = vmul.f32 %v378, 2.0
    %v582 = vmul.f32 %v380, 2.0
    %v583 = vmul.f32 %v491, 2.0
    %v584 = vmul.f32 %v493, 2.0
    %v585 = vmul.f32 %v384, 2.0
    %v586 = vmul.f32 %v386, 2.0
    %v587 = vmul.f32 %v497, 2.0
    %v588 = vmul.f32 %v499, 2.0
    %v589 = vmul.f32 %v390, 2.0
    %v590 = vmul.f32 %v392, 2.0
    %v591 = vmul.f32 %v503, 2.0
    %v592 = vmul.f32 %v505, 2.0
    %v593 = vmul.f32 %v396, 2.0
    %v594 = vmul.f32 %v398, 2.0
    %v595 = vmul.f32 %v509, 2.0
    %v596 = vmul.f32 %v511, 2.0
    %v597 = vsub.f32 %v537, %v565
    %v598 = vsub.f32 %v546, %v566
    %v599 = vsub.f32 %v555, %v567
    %v600 = vsub.f32 %v564, %v568
    %v601 = vsub.f32 %v537, %v569
    %v602 = vsub.f32 %v546, %v570
    %v603 = vsub.f32 %v555, %v571
    %v604 = vsub.f32 %v564, %v572
    %v605 = vsub.f32 %v537, %v573
    %v606 = vsub.f32 %v546, %v574
    %v607 = vsub.f32 %v555, %v575
    %v608 = vsub.f32 %v564, %v576
    %v609 = vsub.f32 %v537, %v577
    %v610 = vsub.f32 %v546, %v578
    %v611 = vsub.f32 %v555, %v579
    %v612 = vsub.f32 %v564, %v580
    %v613 = vsub.f32 %v537, %v581
    %v614 = vsub.f32 %v546, %v582
    %v615 = vsub.f32 %v555, %v583
    %v616 = vsub.f32 %v564, %v584
    %v617 = vsub.f32 %v537, %v585
    %v618 = vsub.f32 %v546, %v586
    %v619 = vsub.f32 %v555, %v587
    %v620 = vsub.f32 %v564, %v588
    %v621 = vsub.f32 %v537, %v589
    %v622 = vsub.f32 %v546, %v590
    %v623 = vsub.f32 %v555, %v591
    %v624 = vsub.f32 %v564, %v592
    %v625 = vsub.f32 %v537, %v593
    %v626 = vsub.f32 %v546, %v594
    %v627 = vsub.f32 %v555, %v595
    %v628 = vsub.f32 %v564, %v596
    %v629 = vld [vmem:[%s4] sm:$0xff]
    %v630 = vld [vmem:[%s4 + $0x8] sm:$0xff]
    %v631 = vld [vmem:[%s4 + $0x10] sm:$0xff]
    %v632 = vld [vmem:[%s4 + $0x18] sm:$0xff]
    %v633 = vld [vmem:[%s4 + $0x20] sm:$0xff]
    %v634 = vld [vmem:[%s4 + $0x28] sm:$0xff]
    %v635 = vld [vmem:[%s4 + $0x30] sm:$0xff]
    %v636 = vld [vmem:[%s4 + $0x38] sm:$0xff]
    %638 = vset.pattern.permute.xlu0 0
    %639 = vperm.xlu0 %638, %v629
    %v640 = vpop.permute.xlu0 %639
    %643 = vset.pattern.permute.xlu0 0
    %644 = vperm.xlu0 %643, %v630
    %v645 = vpop.permute.xlu0 %644
    %648 = vset.pattern.permute.xlu0 0
    %649 = vperm.xlu0 %648, %v631
    %v650 = vpop.permute.xlu0 %649
    %653 = vset.pattern.permute.xlu0 0
    %654 = vperm.xlu0 %653, %v632
    %v655 = vpop.permute.xlu0 %654
    %658 = vset.pattern.permute.xlu0 0
    %659 = vperm.xlu0 %658, %v633
    %v660 = vpop.permute.xlu0 %659
    %663 = vset.pattern.permute.xlu0 0
    %664 = vperm.xlu0 %663, %v634
    %v665 = vpop.permute.xlu0 %664
    %668 = vset.pattern.permute.xlu0 0
    %669 = vperm.xlu0 %668, %v635
    %v670 = vpop.permute.xlu0 %669
    %673 = vset.pattern.permute.xlu0 0
    %674 = vperm.xlu0 %673, %v636
    %v675 = vpop.permute.xlu0 %674
    %v677 = vadd.f32 %v597, %v640
    %v678 = vadd.f32 %v598, %v640
    %v679 = vadd.f32 %v599, %v640
    %v680 = vadd.f32 %v600, %v640
    %v681 = vadd.f32 %v601, %v645
    %v682 = vadd.f32 %v602, %v645
    %v683 = vadd.f32 %v603, %v645
    %v684 = vadd.f32 %v604, %v645
    %v685 = vadd.f32 %v605, %v650
    %v686 = vadd.f32 %v606, %v650
    %v687 = vadd.f32 %v607, %v650
    %v688 = vadd.f32 %v608, %v650
    %v689 = vadd.f32 %v609, %v655
    %v690 = vadd.f32 %v610, %v655
    %v691 = vadd.f32 %v611, %v655
    %v692 = vadd.f32 %v612, %v655
    %v693 = vadd.f32 %v613, %v660
    %v694 = vadd.f32 %v614, %v660
    %v695 = vadd.f32 %v615, %v660
    %v696 = vadd.f32 %v616, %v660
    %v697 = vadd.f32 %v617, %v665
    %v698 = vadd.f32 %v618, %v665
    %v699 = vadd.f32 %v619, %v665
    %v700 = vadd.f32 %v620, %v665
    %v701 = vadd.f32 %v621, %v670
    %v702 = vadd.f32 %v622, %v670
    %v703 = vadd.f32 %v623, %v670
    %v704 = vadd.f32 %v624, %v670
    %v705 = vadd.f32 %v625, %v675
    %v706 = vadd.f32 %v626, %v675
    %v707 = vadd.f32 %v627, %v675
    %v708 = vadd.f32 %v628, %v675
    %v709 = vmin.f32 %v677, %v681
    %v710 = vmin.f32 %v709, %v685
    %v711 = vmin.f32 %v710, %v689
    %v712 = vmin.f32 %v711, %v693
    %v713 = vmin.f32 %v712, %v697
    %v714 = vmin.f32 %v713, %v701
    %v715 = vmin.f32 %v714, %v705
    %v716 = vrot.slane %v715, 4
    %v717 = vmin.f32 %v715, %v716
    %v718 = vrot.slane %v717, 2
    %v719 = vmin.f32 %v717, %v718
    %v720 = vrot.slane %v719, 1
    %v721 = vmin.f32 %v719, %v720
    %v722 = vmin.f32 %v678, %v682
    %v723 = vmin.f32 %v722, %v686
    %v724 = vmin.f32 %v723, %v690
    %v725 = vmin.f32 %v724, %v694
    %v726 = vmin.f32 %v725, %v698
    %v727 = vmin.f32 %v726, %v702
    %v728 = vmin.f32 %v727, %v706
    %v729 = vrot.slane %v728, 4
    %v730 = vmin.f32 %v728, %v729
    %v731 = vrot.slane %v730, 2
    %v732 = vmin.f32 %v730, %v731
    %v733 = vrot.slane %v732, 1
    %v734 = vmin.f32 %v732, %v733
    %v735 = vmin.f32 %v679, %v683
    %v736 = vmin.f32 %v735, %v687
    %v737 = vmin.f32 %v736, %v691
    %v738 = vmin.f32 %v737, %v695
    %v739 = vmin.f32 %v738, %v699
    %v740 = vmin.f32 %v739, %v703
    %v741 = vmin.f32 %v740, %v707
    %v742 = vrot.slane %v741, 4
    %v743 = vmin.f32 %v741, %v742
    %v744 = vrot.slane %v743, 2
    %v745 = vmin.f32 %v743, %v744
    %v746 = vrot.slane %v745, 1
    %v747 = vmin.f32 %v745, %v746
    %v748 = vmin.f32 %v680, %v684
    %v749 = vmin.f32 %v748, %v688
    %v750 = vmin.f32 %v749, %v692
    %v751 = vmin.f32 %v750, %v696
    %v752 = vmin.f32 %v751, %v700
    %v753 = vmin.f32 %v752, %v704
    %v754 = vmin.f32 %v753, %v708
    %v755 = vrot.slane %v754, 4
    %v756 = vmin.f32 %v754, %v755
    %v757 = vrot.slane %v756, 2
    %v758 = vmin.f32 %v756, %v757
    %v759 = vrot.slane %v758, 1
    %v760 = vmin.f32 %v758, %v759
    %v761 = vlaneseq
    %v762 = vshrl.u32 %v761, 7
    %v763 = vadd.s32 %v762, 8
    %v764 = vadd.s32 %v762, 16
    %v765 = vadd.s32 %v762, 24
    %v766 = vadd.s32 %v762, 32
    %v767 = vadd.s32 %v762, 40
    %v768 = vadd.s32 %v762, 48
    %v769 = vadd.s32 %v762, 56
    %vm770 = vcmp.le.f32.partialorder %v677, %v721
    %vm771 = vcmp.le.f32.partialorder %v678, %v734
    %vm772 = vcmp.le.f32.partialorder %v679, %v747
    %vm773 = vcmp.le.f32.partialorder %v680, %v760
    %vm774 = vcmp.le.f32.partialorder %v681, %v721
    %vm775 = vcmp.le.f32.partialorder %v682, %v734
    %vm776 = vcmp.le.f32.partialorder %v683, %v747
    %vm777 = vcmp.le.f32.partialorder %v684, %v760
    %vm778 = vcmp.le.f32.partialorder %v685, %v721
    %vm779 = vcmp.le.f32.partialorder %v686, %v734
    %vm780 = vcmp.le.f32.partialorder %v687, %v747
    %vm781 = vcmp.le.f32.partialorder %v688, %v760
    %vm782 = vcmp.le.f32.partialorder %v689, %v721
    %vm783 = vcmp.le.f32.partialorder %v690, %v734
    %vm784 = vcmp.le.f32.partialorder %v691, %v747
    %vm785 = vcmp.le.f32.partialorder %v692, %v760
    %vm786 = vcmp.le.f32.partialorder %v693, %v721
    %vm787 = vcmp.le.f32.partialorder %v694, %v734
    %vm788 = vcmp.le.f32.partialorder %v695, %v747
    %vm789 = vcmp.le.f32.partialorder %v696, %v760
    %vm790 = vcmp.le.f32.partialorder %v697, %v721
    %vm791 = vcmp.le.f32.partialorder %v698, %v734
    %vm792 = vcmp.le.f32.partialorder %v699, %v747
    %vm793 = vcmp.le.f32.partialorder %v700, %v760
    %vm794 = vcmp.le.f32.partialorder %v701, %v721
    %vm795 = vcmp.le.f32.partialorder %v702, %v734
    %vm796 = vcmp.le.f32.partialorder %v703, %v747
    %vm797 = vcmp.le.f32.partialorder %v704, %v760
    %vm798 = vcmp.le.f32.partialorder %v705, %v721
    %vm799 = vcmp.le.f32.partialorder %v706, %v734
    %vm800 = vcmp.le.f32.partialorder %v707, %v747
    %vm801 = vcmp.le.f32.partialorder %v708, %v760
    %v802 = vsel %vm770, %v762, 64
    %v803 = vsel %vm771, %v762, 64
    %v804 = vsel %vm772, %v762, 64
    %v805 = vsel %vm773, %v762, 64
    %v806 = vsel %vm774, %v763, 64
    %v807 = vsel %vm775, %v763, 64
    %v808 = vsel %vm776, %v763, 64
    %v809 = vsel %vm777, %v763, 64
    %v810 = vsel %vm778, %v764, 64
    %v811 = vsel %vm779, %v764, 64
    %v812 = vsel %vm780, %v764, 64
    %v813 = vsel %vm781, %v764, 64
    %v814 = vsel %vm782, %v765, 64
    %v815 = vsel %vm783, %v765, 64
    %v816 = vsel %vm784, %v765, 64
    %v817 = vsel %vm785, %v765, 64
    %v818 = vsel %vm786, %v766, 64
    %v819 = vsel %vm787, %v766, 64
    %v820 = vsel %vm788, %v766, 64
    %v821 = vsel %vm789, %v766, 64
    %v822 = vsel %vm790, %v767, 64
    %v823 = vsel %vm791, %v767, 64
    %v824 = vsel %vm792, %v767, 64
    %v825 = vsel %vm793, %v767, 64
    %v826 = vsel %vm794, %v768, 64
    %v827 = vsel %vm795, %v768, 64
    %v828 = vsel %vm796, %v768, 64
    %v829 = vsel %vm797, %v768, 64
    %v830 = vsel %vm798, %v769, 64
    %v831 = vsel %vm799, %v769, 64
    %v832 = vsel %vm800, %v769, 64
    %v833 = vsel %vm801, %v769, 64
    %vm834 = vcmp.lt.s32.totalorder %v802, %v806
    %v835 = vsel %vm834, %v802, %v806
    %vm836 = vcmp.lt.s32.totalorder %v835, %v810
    %v837 = vsel %vm836, %v835, %v810
    %vm838 = vcmp.lt.s32.totalorder %v837, %v814
    %v839 = vsel %vm838, %v837, %v814
    %vm840 = vcmp.lt.s32.totalorder %v839, %v818
    %v841 = vsel %vm840, %v839, %v818
    %vm842 = vcmp.lt.s32.totalorder %v841, %v822
    %v843 = vsel %vm842, %v841, %v822
    %vm844 = vcmp.lt.s32.totalorder %v843, %v826
    %v845 = vsel %vm844, %v843, %v826
    %vm846 = vcmp.lt.s32.totalorder %v845, %v830
    %v847 = vsel %vm846, %v845, %v830
    %v848 = vrot.slane %v847, 4
    %vm849 = vcmp.lt.s32.totalorder %v847, %v848
    %v850 = vsel %vm849, %v847, %v848
    %v851 = vrot.slane %v850, 2
    %vm852 = vcmp.lt.s32.totalorder %v850, %v851
    %v853 = vsel %vm852, %v850, %v851
    %v854 = vrot.slane %v853, 1
    %vm855 = vcmp.lt.s32.totalorder %v853, %v854
    %v856 = vsel %vm855, %v853, %v854
    %vm857 = vcmp.lt.s32.totalorder %v803, %v807
    %v858 = vsel %vm857, %v803, %v807
    %vm859 = vcmp.lt.s32.totalorder %v858, %v811
    %v860 = vsel %vm859, %v858, %v811
    %vm861 = vcmp.lt.s32.totalorder %v860, %v815
    %v862 = vsel %vm861, %v860, %v815
    %vm863 = vcmp.lt.s32.totalorder %v862, %v819
    %v864 = vsel %vm863, %v862, %v819
    %vm865 = vcmp.lt.s32.totalorder %v864, %v823
    %v866 = vsel %vm865, %v864, %v823
    %vm867 = vcmp.lt.s32.totalorder %v866, %v827
    %v868 = vsel %vm867, %v866, %v827
    %vm869 = vcmp.lt.s32.totalorder %v868, %v831
    %v870 = vsel %vm869, %v868, %v831
    %v871 = vrot.slane %v870, 4
    %vm872 = vcmp.lt.s32.totalorder %v870, %v871
    %v873 = vsel %vm872, %v870, %v871
    %v874 = vrot.slane %v873, 2
    %vm875 = vcmp.lt.s32.totalorder %v873, %v874
    %v876 = vsel %vm875, %v873, %v874
    %v877 = vrot.slane %v876, 1
    %vm878 = vcmp.lt.s32.totalorder %v876, %v877
    %v879 = vsel %vm878, %v876, %v877
    %vm880 = vcmp.lt.s32.totalorder %v804, %v808
    %v881 = vsel %vm880, %v804, %v808
    %vm882 = vcmp.lt.s32.totalorder %v881, %v812
    %v883 = vsel %vm882, %v881, %v812
    %vm884 = vcmp.lt.s32.totalorder %v883, %v816
    %v885 = vsel %vm884, %v883, %v816
    %vm886 = vcmp.lt.s32.totalorder %v885, %v820
    %v887 = vsel %vm886, %v885, %v820
    %vm888 = vcmp.lt.s32.totalorder %v887, %v824
    %v889 = vsel %vm888, %v887, %v824
    %vm890 = vcmp.lt.s32.totalorder %v889, %v828
    %v891 = vsel %vm890, %v889, %v828
    %vm892 = vcmp.lt.s32.totalorder %v891, %v832
    %v893 = vsel %vm892, %v891, %v832
    %v894 = vrot.slane %v893, 4
    %vm895 = vcmp.lt.s32.totalorder %v893, %v894
    %v896 = vsel %vm895, %v893, %v894
    %v897 = vrot.slane %v896, 2
    %vm898 = vcmp.lt.s32.totalorder %v896, %v897
    %v899 = vsel %vm898, %v896, %v897
    %v900 = vrot.slane %v899, 1
    %vm901 = vcmp.lt.s32.totalorder %v899, %v900
    %v902 = vsel %vm901, %v899, %v900
    %vm903 = vcmp.lt.s32.totalorder %v805, %v809
    %v904 = vsel %vm903, %v805, %v809
    %vm905 = vcmp.lt.s32.totalorder %v904, %v813
    %v906 = vsel %vm905, %v904, %v813
    %vm907 = vcmp.lt.s32.totalorder %v906, %v817
    %v908 = vsel %vm907, %v906, %v817
    %vm909 = vcmp.lt.s32.totalorder %v908, %v821
    %v910 = vsel %vm909, %v908, %v821
    %vm911 = vcmp.lt.s32.totalorder %v910, %v825
    %v912 = vsel %vm911, %v910, %v825
    %vm913 = vcmp.lt.s32.totalorder %v912, %v829
    %v914 = vsel %vm913, %v912, %v829
    %vm915 = vcmp.lt.s32.totalorder %v914, %v833
    %v916 = vsel %vm915, %v914, %v833
    %v917 = vrot.slane %v916, 4
    %vm918 = vcmp.lt.s32.totalorder %v916, %v917
    %v919 = vsel %vm918, %v916, %v917
    %v920 = vrot.slane %v919, 2
    %vm921 = vcmp.lt.s32.totalorder %v919, %v920
    %v922 = vsel %vm921, %v919, %v920
    %v923 = vrot.slane %v922, 1
    %vm924 = vcmp.lt.s32.totalorder %v922, %v923
    %v925 = vsel %vm924, %v922, %v923
    %v926 = vcombine.low %v856, %v879
    %v927 = vcombine.low %v902, %v925
    %v929 = vunpack.c.l.s4 1966171168
    %v930 = vunpack.c.0.s8 %v929
    %v931 = vlaneseq
    %v932 = vshrl.u32 %v931, 7
    %v933 = vsub.s32 %v930, %v932
    %v934 = vrot.slane %v926, %v933
    %v936 = vunpack.c.l.s4 1966171168
    %v937 = vunpack.c.0.s8 %v936
    %v938 = vlaneseq
    %v939 = vshrl.u32 %v938, 7
    %v940 = vsub.s32 %v937, %v939
    %v941 = vrot.slane %v927, %v940
    %v942 = vcombine.low %v934, %v941
    %v944 = vunpack.c.l.s4 1966171168
    %v945 = vunpack.c.0.s8 %v944
    %v946 = vlaneseq
    %v947 = vshrl.u32 %v946, 7
    %v948 = vsub.s32 %v945, %v947
    %v949 = vrot.slane %v942, %v948
    %v950 = vlaneseq
    %vm951 = vcmp.ge.s32.totalorder %v950, 0
    %vm952 = vcmp.lt.s32.totalorder %v950, 512
    %vm953 = vmand %vm951, %vm952
    %954 = vst.msk [vmem:[#allocation4] sm:$0xf] %vm953, %v949
    %vm955 = vcmp.eq.s32.totalorder %v762, %v856
    %vm956 = vcmp.eq.s32.totalorder %v762, %v879
    %vm957 = vcmp.eq.s32.totalorder %v762, %v902
    %vm958 = vcmp.eq.s32.totalorder %v762, %v925
    %vm959 = vcmp.eq.s32.totalorder %v763, %v856
    %vm960 = vcmp.eq.s32.totalorder %v763, %v879
    %vm961 = vcmp.eq.s32.totalorder %v763, %v902
    %vm962 = vcmp.eq.s32.totalorder %v763, %v925
    %vm963 = vcmp.eq.s32.totalorder %v764, %v856
    %vm964 = vcmp.eq.s32.totalorder %v764, %v879
    %vm965 = vcmp.eq.s32.totalorder %v764, %v902
    %vm966 = vcmp.eq.s32.totalorder %v764, %v925
    %vm967 = vcmp.eq.s32.totalorder %v765, %v856
    %vm968 = vcmp.eq.s32.totalorder %v765, %v879
    %vm969 = vcmp.eq.s32.totalorder %v765, %v902
    %vm970 = vcmp.eq.s32.totalorder %v765, %v925
    %vm971 = vcmp.eq.s32.totalorder %v766, %v856
    %vm972 = vcmp.eq.s32.totalorder %v766, %v879
    %vm973 = vcmp.eq.s32.totalorder %v766, %v902
    %vm974 = vcmp.eq.s32.totalorder %v766, %v925
    %vm975 = vcmp.eq.s32.totalorder %v767, %v856
    %vm976 = vcmp.eq.s32.totalorder %v767, %v879
    %vm977 = vcmp.eq.s32.totalorder %v767, %v902
    %vm978 = vcmp.eq.s32.totalorder %v767, %v925
    %vm979 = vcmp.eq.s32.totalorder %v768, %v856
    %vm980 = vcmp.eq.s32.totalorder %v768, %v879
    %vm981 = vcmp.eq.s32.totalorder %v768, %v902
    %vm982 = vcmp.eq.s32.totalorder %v768, %v925
    %vm983 = vcmp.eq.s32.totalorder %v769, %v856
    %vm984 = vcmp.eq.s32.totalorder %v769, %v879
    %vm985 = vcmp.eq.s32.totalorder %v769, %v902
    %vm986 = vcmp.eq.s32.totalorder %v769, %v925
    %v987 = vsel %vm955, 1, 0
    %v988 = vsel %vm956, 1, 0
    %v989 = vsel %vm957, 1, 0
    %v990 = vsel %vm958, 1, 0
    %v991 = vsel %vm959, 1, 0
    %v992 = vsel %vm960, 1, 0
    %v993 = vsel %vm961, 1, 0
    %v994 = vsel %vm962, 1, 0
    %v995 = vsel %vm963, 1, 0
    %v996 = vsel %vm964, 1, 0
    %v997 = vsel %vm965, 1, 0
    %v998 = vsel %vm966, 1, 0
    %v999 = vsel %vm967, 1, 0
    %v1000 = vsel %vm968, 1, 0
    %v1001 = vsel %vm969, 1, 0
    %v1002 = vsel %vm970, 1, 0
    %v1003 = vsel %vm971, 1, 0
    %v1004 = vsel %vm972, 1, 0
    %v1005 = vsel %vm973, 1, 0
    %v1006 = vsel %vm974, 1, 0
    %v1007 = vsel %vm975, 1, 0
    %v1008 = vsel %vm976, 1, 0
    %v1009 = vsel %vm977, 1, 0
    %v1010 = vsel %vm978, 1, 0
    %v1011 = vsel %vm979, 1, 0
    %v1012 = vsel %vm980, 1, 0
    %v1013 = vsel %vm981, 1, 0
    %v1014 = vsel %vm982, 1, 0
    %v1015 = vsel %vm983, 1, 0
    %v1016 = vsel %vm984, 1, 0
    %v1017 = vsel %vm985, 1, 0
    %v1018 = vsel %vm986, 1, 0
    %v1019 = vcvt.s32.f32 %v987
    %v1020 = vcvt.s32.f32 %v988
    %v1021 = vcvt.s32.f32 %v989
    %v1022 = vcvt.s32.f32 %v990
    %v1023 = vcvt.s32.f32 %v991
    %v1024 = vcvt.s32.f32 %v992
    %v1025 = vcvt.s32.f32 %v993
    %v1026 = vcvt.s32.f32 %v994
    %v1027 = vcvt.s32.f32 %v995
    %v1028 = vcvt.s32.f32 %v996
    %v1029 = vcvt.s32.f32 %v997
    %v1030 = vcvt.s32.f32 %v998
    %v1031 = vcvt.s32.f32 %v999
    %v1032 = vcvt.s32.f32 %v1000
    %v1033 = vcvt.s32.f32 %v1001
    %v1034 = vcvt.s32.f32 %v1002
    %v1035 = vcvt.s32.f32 %v1003
    %v1036 = vcvt.s32.f32 %v1004
    %v1037 = vcvt.s32.f32 %v1005
    %v1038 = vcvt.s32.f32 %v1006
    %v1039 = vcvt.s32.f32 %v1007
    %v1040 = vcvt.s32.f32 %v1008
    %v1041 = vcvt.s32.f32 %v1009
    %v1042 = vcvt.s32.f32 %v1010
    %v1043 = vcvt.s32.f32 %v1011
    %v1044 = vcvt.s32.f32 %v1012
    %v1045 = vcvt.s32.f32 %v1013
    %v1046 = vcvt.s32.f32 %v1014
    %v1047 = vcvt.s32.f32 %v1015
    %v1048 = vcvt.s32.f32 %v1016
    %v1049 = vcvt.s32.f32 %v1017
    %v1050 = vcvt.s32.f32 %v1018
    %v1051 = vld [vmem:[%s5] sm:$0xf]
    %v1052 = vld [vmem:[%s6] sm:$0xf]
    %1054 = vset.pattern.permute.xlu0 0
    %1055 = vperm.xlu0 %1054, %v1052
    %v1056 = vpop.permute.xlu0 %1055
    %vm1058 = vcmask 523264
    %v1060 = vsel %vm1058, %v1051, 0
    %1062 = vmatprep.subr.mxu0 %v1020
    %1063 = vmatpush1.msra.mxu0 %v1019
    %1064 = vmatprep.subr.mxu0 %v1024
    %1065 = vmatpush1.msra.mxu0 %v1023
    %1066 = vmatprep.subr.mxu0 %v1028
    %1067 = vmatpush1.msra.mxu0 %v1027
    %1068 = vmatprep.subr.mxu0 %v1032
    %1069 = vmatpush1.msra.mxu0 %v1031
    %1070 = vmatprep.subr.mxu0 %v1036
    %1071 = vmatpush1.msra.mxu0 %v1035
    %1072 = vmatprep.subr.mxu0 %v1040
    %1073 = vmatpush1.msra.mxu0 %v1039
    %1074 = vmatprep.subr.mxu0 %v1044
    %1075 = vmatpush1.msra.mxu0 %v1043
    %1076 = vmatprep.subr.mxu0 %v1048
    %1077 = vmatpush1.msra.mxu0 %v1047
    %1078 = vmatprep.subr.mxu0 0.0
    %1079 = vmatpush1.msra.mxu0 0.0
    %1080 = vmatprep.subr.mxu0 0.0
    %1081 = vmatpush1.msra.mxu0 0.0
    %1082 = vmatprep.subr.mxu0 0.0
    %1083 = vmatpush1.msra.mxu0 0.0
    %1084 = vmatprep.subr.mxu0 0.0
    %1085 = vmatpush1.msra.mxu0 0.0
    %1086 = vmatprep.subr.mxu0 0.0
    %1087 = vmatpush1.msra.mxu0 0.0
    %1088 = vmatprep.subr.mxu0 0.0
    %1089 = vmatpush1.msra.mxu0 0.0
    %1090 = vmatprep.subr.mxu0 0.0
    %1091 = vmatpush1.msra.mxu0 0.0
    %1092 = vmatprep.subr.mxu0 0.0
    %1093 = vmatpush1.msra.mxu0 0.0
    %1094 = vmatprep.subr.mxu0 0.0
    %1095 = vmatpush1.msra.mxu0 0.0
    %1096 = vmatprep.subr.mxu0 0.0
    %1097 = vmatpush1.msra.mxu0 0.0
    %1098 = vmatprep.subr.mxu0 0.0
    %1099 = vmatpush1.msra.mxu0 0.0
    %1100 = vmatprep.subr.mxu0 0.0
    %1101 = vmatpush1.msra.mxu0 0.0
    %1102 = vmatprep.subr.mxu0 0.0
    %1103 = vmatpush1.msra.mxu0 0.0
    %1104 = vmatprep.subr.mxu0 0.0
    %1105 = vmatpush1.msra.mxu0 0.0
    %1106 = vmatprep.subr.mxu0 0.0
    %1107 = vmatpush1.msra.mxu0 0.0
    %1108 = vmatprep.subr.mxu0 0.0
    %1109 = vmatpush1.msra.mxu0 0.0
    %1110 = vmatprep.subr.mxu0 0.0
    %1111 = vmatpush1.msra.mxu0 0.0
    %1112 = vmatprep.subr.mxu0 0.0
    %1113 = vmatpush1.msra.mxu0 0.0
    %1114 = vmatprep.subr.mxu0 0.0
    %1115 = vmatpush1.msra.mxu0 0.0
    %1116 = vmatprep.subr.mxu0 0.0
    %1117 = vmatpush1.msra.mxu0 0.0
    %1118 = vmatprep.subr.mxu0 0.0
    %1119 = vmatpush1.msra.mxu0 0.0
    %1120 = vmatprep.subr.mxu0 0.0
    %1121 = vmatpush1.msra.mxu0 0.0
    %1122 = vmatprep.subr.mxu0 0.0
    %1123 = vmatpush1.msra.mxu0 0.0
    %1124 = vmatprep.subr.mxu0 0.0
    %1125 = vmatpush1.msra.mxu0 0.0
    %1126 = vmatprep.mubr.f32.mxu0 0.0
    %1127 = vmatmul.mubr.f32.gmra.mrb[0].mxu0 %v1060
    %v1128 = vpop.f32.mrb[0].mxu0
    %v1129 = vadd.f32 %v1056, %v1128
    %v1130 = vpop.f32.mrb[0].mxu0
    %v1131 = vadd.f32 %v1056, %v1130
    %1132 = vdwg.mxu0
    %1133 = vmatprep.subr.mxu0 %v1022
    %1134 = vmatpush1.msra.mxu0 %v1021
    %1135 = vmatprep.subr.mxu0 %v1026
    %1136 = vmatpush1.msra.mxu0 %v1025
    %1137 = vmatprep.subr.mxu0 %v1030
    %1138 = vmatpush1.msra.mxu0 %v1029
    %1139 = vmatprep.subr.mxu0 %v1034
    %1140 = vmatpush1.msra.mxu0 %v1033
    %1141 = vmatprep.subr.mxu0 %v1038
    %1142 = vmatpush1.msra.mxu0 %v1037
    %1143 = vmatprep.subr.mxu0 %v1042
    %1144 = vmatpush1.msra.mxu0 %v1041
    %1145 = vmatprep.subr.mxu0 %v1046
    %1146 = vmatpush1.msra.mxu0 %v1045
    %1147 = vmatprep.subr.mxu0 %v1050
    %1148 = vmatpush1.msra.mxu0 %v1049
    %1149 = vmatprep.subr.mxu0 0.0
    %1150 = vmatpush1.msra.mxu0 0.0
    %1151 = vmatprep.subr.mxu0 0.0
    %1152 = vmatpush1.msra.mxu0 0.0
    %1153 = vmatprep.subr.mxu0 0.0
    %1154 = vmatpush1.msra.mxu0 0.0
    %1155 = vmatprep.subr.mxu0 0.0
    %1156 = vmatpush1.msra.mxu0 0.0
    %1157 = vmatprep.subr.mxu0 0.0
    %1158 = vmatpush1.msra.mxu0 0.0
    %1159 = vmatprep.subr.mxu0 0.0
    %1160 = vmatpush1.msra.mxu0 0.0
    %1161 = vmatprep.subr.mxu0 0.0
    %1162 = vmatpush1.msra.mxu0 0.0
    %1163 = vmatprep.subr.mxu0 0.0
    %1164 = vmatpush1.msra.mxu0 0.0
    %1165 = vmatprep.subr.mxu0 0.0
    %1166 = vmatpush1.msra.mxu0 0.0
    %1167 = vmatprep.subr.mxu0 0.0
    %1168 = vmatpush1.msra.mxu0 0.0
    %1169 = vmatprep.subr.mxu0 0.0
    %1170 = vmatpush1.msra.mxu0 0.0
    %1171 = vmatprep.subr.mxu0 0.0
    %1172 = vmatpush1.msra.mxu0 0.0
    %1173 = vmatprep.subr.mxu0 0.0
    %1174 = vmatpush1.msra.mxu0 0.0
    %1175 = vmatprep.subr.mxu0 0.0
    %1176 = vmatpush1.msra.mxu0 0.0
    %1177 = vmatprep.subr.mxu0 0.0
    %1178 = vmatpush1.msra.mxu0 0.0
    %1179 = vmatprep.subr.mxu0 0.0
    %1180 = vmatpush1.msra.mxu0 0.0
    %1181 = vmatprep.subr.mxu0 0.0
    %1182 = vmatpush1.msra.mxu0 0.0
    %1183 = vmatprep.subr.mxu0 0.0
    %1184 = vmatpush1.msra.mxu0 0.0
    %1185 = vmatprep.subr.mxu0 0.0
    %1186 = vmatpush1.msra.mxu0 0.0
    %1187 = vmatprep.subr.mxu0 0.0
    %1188 = vmatpush1.msra.mxu0 0.0
    %1189 = vmatprep.subr.mxu0 0.0
    %1190 = vmatpush1.msra.mxu0 0.0
    %1191 = vmatprep.subr.mxu0 0.0
    %1192 = vmatpush1.msra.mxu0 0.0
    %1193 = vmatprep.subr.mxu0 0.0
    %1194 = vmatpush1.msra.mxu0 0.0
    %1195 = vmatprep.subr.mxu0 0.0
    %1196 = vmatpush1.msra.mxu0 0.0
    %1197 = vmatprep.mubr.f32.mxu0 0.0
    %1198 = vmatmul.mubr.f32.gmra.mrb[0].mxu0 %v1060
    %v1199 = vpop.f32.mrb[0].mxu0
    %v1200 = vadd.f32 %v1056, %v1199
    %v1201 = vpop.f32.mrb[0].mxu0
    %v1202 = vadd.f32 %v1056, %v1201
    %1203 = vdwg.mxu0
    %v1208 = vcombine.low %v1129, %v1131
    %v1209 = vcombine.low %v1200, %v1202
    %1212 = vst [vmem:[#allocation2] sm:$0xff] %v1208
    %1213 = vst [vmem:[#allocation2 + $0x8] sm:$0xff] %v1209
    %s1214 = smul.u32 0, 512
    %v1215 = vlaneseq
    %v1216 = vand.u32 %v1215, 127
    %v1217 = vadd.s32 %v1216, 128
    %v1218 = vadd.s32 %v1216, 256
    %v1219 = vadd.s32 %v1216, 384
    %v1220 = vstv %s1214
    %v1221 = vadd.s32 %v1220, %v1216
    %v1222 = vadd.s32 %v1220, %v1217
    %v1223 = vadd.s32 %v1220, %v1218
    %v1224 = vadd.s32 %v1220, %v1219
    %vm1225 = vcmp.lt.s32.totalorder %v1221, 512
    %vm1226 = vcmp.lt.s32.totalorder %v1222, 512
    %vm1227 = vcmp.lt.s32.totalorder %v1223, 512
    %vm1228 = vcmp.lt.s32.totalorder %v1224, 512
    %v1229 = vsub.f32 %v1129, %v31
    %v1230 = vsub.f32 %v1131, %v32
    %v1231 = vsub.f32 %v1200, %v33
    %v1232 = vsub.f32 %v1202, %v34
    %v1233 = vmul.f32 %v1229, %v1229
    %v1234 = vmul.f32 %v1230, %v1230
    %v1235 = vmul.f32 %v1231, %v1231
    %v1236 = vmul.f32 %v1232, %v1232
    %vm1237 = vcmask 1043456
    %v1238 = vsel %vm1237, %v1233, 0.0
    %v1239 = vrot.slane %v1238, 4
    %v1240 = vadd.f32 %v1238, %v1239
    %v1241 = vrot.slane %v1240, 2
    %v1242 = vadd.f32 %v1240, %v1241
    %v1243 = vrot.slane %v1242, 1
    %v1244 = vadd.f32 %v1242, %v1243
    %v1245 = vsel %vm1237, %v1234, 0.0
    %v1246 = vrot.slane %v1245, 4
    %v1247 = vadd.f32 %v1245, %v1246
    %v1248 = vrot.slane %v1247, 2
    %v1249 = vadd.f32 %v1247, %v1248
    %v1250 = vrot.slane %v1249, 1
    %v1251 = vadd.f32 %v1249, %v1250
    %v1252 = vsel %vm1237, %v1235, 0.0
    %v1253 = vrot.slane %v1252, 4
    %v1254 = vadd.f32 %v1252, %v1253
    %v1255 = vrot.slane %v1254, 2
    %v1256 = vadd.f32 %v1254, %v1255
    %v1257 = vrot.slane %v1256, 1
    %v1258 = vadd.f32 %v1256, %v1257
    %v1259 = vsel %vm1237, %v1236, 0.0
    %v1260 = vrot.slane %v1259, 4
    %v1261 = vadd.f32 %v1259, %v1260
    %v1262 = vrot.slane %v1261, 2
    %v1263 = vadd.f32 %v1261, %v1262
    %v1264 = vrot.slane %v1263, 1
    %v1265 = vadd.f32 %v1263, %v1264
    %v1266 = vsel %vm1225, %v1244, 0.0
    %v1267 = vsel %vm1226, %v1251, 0.0
    %v1268 = vsel %vm1227, %v1258, 0.0
    %v1269 = vsel %vm1228, %v1265, 0.0
    %vm1270 = vcmask 1040384
    %v1271 = vsel %vm1270, %v1266, 0.0
    %v1272 = vsel %vm1270, %v1267, 0.0
    %v1273 = vadd.f32 %v1271, %v1272
    %v1274 = vsel %vm1270, %v1268, 0.0
    %v1275 = vadd.f32 %v1273, %v1274
    %v1276 = vsel %vm1270, %v1269, 0.0
    %v1277 = vadd.f32 %v1275, %v1276
    %1278 = vadd.xlane.f32.xlu0 %v1277
    %v1279 = vpop.xlane.xlu0 %1278
    %v1280 = vrot.slane %v1279, 4
    %v1281 = vadd.f32 %v1279, %v1280
    %v1282 = vrot.slane %v1281, 2
    %v1283 = vadd.f32 %v1281, %v1282
    %v1284 = vrot.slane %v1283, 1
    %v1285 = vadd.f32 %v1283, %v1284
    %s1286 = vtos %v1285
    %v1287 = vmax.f32 %v721, 0.0
    %v1288 = vmax.f32 %v734, 0.0
    %v1289 = vmax.f32 %v747, 0.0
    %v1290 = vmax.f32 %v760, 0.0
    %v1291 = vsel %vm1225, %v1287, 0.0
    %v1292 = vsel %vm1226, %v1288, 0.0
    %v1293 = vsel %vm1227, %v1289, 0.0
    %v1294 = vsel %vm1228, %v1290, 0.0
    %v1295 = vsel %vm1270, %v1291, 0.0
    %v1296 = vsel %vm1270, %v1292, 0.0
    %v1297 = vadd.f32 %v1295, %v1296
    %v1298 = vsel %vm1270, %v1293, 0.0
    %v1299 = vadd.f32 %v1297, %v1298
    %v1300 = vsel %vm1270, %v1294, 0.0
    %v1301 = vadd.f32 %v1299, %v1300
    %1302 = vadd.xlane.f32.xlu0 %v1301
    %v1303 = vpop.xlane.xlu0 %1302
    %v1304 = vrot.slane %v1303, 4
    %v1305 = vadd.f32 %v1303, %v1304
    %v1306 = vrot.slane %v1305, 2
    %v1307 = vadd.f32 %v1305, %v1306
    %v1308 = vrot.slane %v1307, 1
    %v1309 = vadd.f32 %v1307, %v1308
    %s1310 = vtos %v1309
    %vm1311 = vcmp.eq.s32.totalorder %v1216, 0
    %vm1312 = vcmp.eq.s32.totalorder %v1216, 1
    %v1313 = vstv %s1310
    %v1314 = vsel %vm1312, %v1313, 0.0
    %v1315 = vstv %s1286
    %v1316 = vsel %vm1311, %v1315, %v1314
    %1317 = vst [vmem:[#allocation6] sm:$0x1] %v1316
    // Predicated region
    $region30: #{tpu_custom_call.1} parent=1 // pred_check
      _
    $region31: #{tpu_custom_call.1} parent=1 // pred_check_branch
      %1319 = sbr.rel (0) target = $region33
    $region32: #{tpu_custom_call.1} parent=1 // pred_region
      %s1321 = ssub.s32 256, 256
      %1322 = vsyncadd [#allocation3], %s1321
      %s1324 = sshll.u32 [#allocation2], 4
      %s1325 = int_to_ptr.vmem [resolvable:$true] %s1324
      %1327 = dma.vmem_to_hbm [thread:$0]  %s1325, 256, %s7, [#allocation3]
    $region33: #{tpu_custom_call.1} parent=1 // pred_fallthru
      _
    // Predicated region
    $region34: #{tpu_custom_call.1} parent=1 // pred_check
      _
    $region35: #{tpu_custom_call.1} parent=1 // pred_check_branch
      %1329 = sbr.rel (0) target = $region37
    $region36: #{tpu_custom_call.1} parent=1 // pred_region
      %s1331 = ssub.s32 64, 64
      %1332 = vsyncadd [#allocation5], %s1331
      %s1334 = sshll.u32 [#allocation4], 4
      %s1335 = int_to_ptr.vmem [resolvable:$true] %s1334
      %1337 = dma.vmem_to_hbm [thread:$0]  %s1335, 64, %s8, [#allocation5]
    $region37: #{tpu_custom_call.1} parent=1 // pred_fallthru
      _
    // Predicated region
    $region38: #{tpu_custom_call.1} parent=1 // pred_check
      _
    $region39: #{tpu_custom_call.1} parent=1 // pred_check_branch
      %1339 = sbr.rel (0) target = $region41
    $region40: #{tpu_custom_call.1} parent=1 // pred_region
      %s1341 = ssub.s32 16, 16
      %1342 = vsyncadd [#allocation5], %s1341
      %s1344 = sshll.u32 [#allocation6], 4
      %s1345 = int_to_ptr.vmem [resolvable:$true] %s1344
      %1347 = dma.vmem_to_hbm [thread:$0]  %s1345, 16, %s9, [#allocation5]
    $region41: #{tpu_custom_call.1} parent=1 // pred_fallthru
      _
    // Predicated region
    $region42: #{tpu_custom_call.1} parent=1 // pred_check
      _
    $region43: #{tpu_custom_call.1} parent=1 // pred_check_branch
      %1349 = sbr.rel (0) target = $region45
    $region44: #{tpu_custom_call.1} parent=1 // pred_region
      %1350 = dma.done [#allocation3], 256
    $region45: #{tpu_custom_call.1} parent=1 // pred_fallthru
      _
    // Predicated region
    $region46: #{tpu_custom_call.1} parent=1 // pred_check
      _
    $region47: #{tpu_custom_call.1} parent=1 // pred_check_branch
      %1352 = sbr.rel (0) target = $region49
    $region48: #{tpu_custom_call.1} parent=1 // pred_region
      %1353 = dma.done [#allocation5], 64
    $region49: #{tpu_custom_call.1} parent=1 // pred_fallthru
      _
    // Predicated region
    $region50: #{tpu_custom_call.1} parent=1 // pred_check
      _
    $region51: #{tpu_custom_call.1} parent=1 // pred_check_branch
      %1355 = sbr.rel (0) target = $region53
    $region52: #{tpu_custom_call.1} parent=1 // pred_region
      %1356 = dma.done [#allocation5], 16
    $region53: #{tpu_custom_call.1} parent=1 // pred_fallthru
      _
    %1357 = vsyncpa [#allocation3], 1
    %1358 = vsyncpa [#allocation5], 1

</llo_original>
